<compile_context>
chip_gen: v7x
topology: tpu7x:2x2x1
jax: 0.10.0
libtpu: 0.0.40
codegen_flags: <defaults>
</compile_context>

<pallas_src>
import functools

import jax
import jax.numpy as jnp
from jax.experimental import pallas as pl
from jax.experimental.pallas import tpu as pltpu

BN_EPS = 1e-5
LANE = 128


def _round_up(x, m):
    return (x + m - 1) // m * m


def _pad2d(x, rows, cols):
    return jnp.pad(x, ((0, rows - x.shape[0]), (0, cols - x.shape[1])))


# --------------------- pass 1: (A+I)@z  +  MLP  +  BN partial statistics ----

def _agg_mlp_kernel(a_ref, z_ref, w1_ref, b1_ref, w2_ref, b2_ref,
                    h2_ref, stats_ref, acc_ref, *, n_valid, tile_m):
    i = pl.program_id(0)
    k = pl.program_id(1)

    @pl.when(k == 0)
    def _():
        acc_ref[...] = jnp.zeros_like(acc_ref)

    # GIN aggregation with eps=0 and the self-loop folded into A: (A + I) @ z.
    a = a_ref[...].astype(jnp.float32)
    acc_ref[...] += jnp.dot(a, z_ref[...], preferred_element_type=jnp.float32)

    @pl.when(k == pl.num_programs(1) - 1)
    def _():
        h = acc_ref[...]
        # nn.Sequential(Linear, ReLU, Linear)
        h1 = jnp.dot(h, w1_ref[...], preferred_element_type=jnp.float32) + b1_ref[...]
        h1 = jnp.maximum(h1, 0.0)
        h2 = jnp.dot(h1, w2_ref[...], preferred_element_type=jnp.float32) + b2_ref[...]
        # F.relu in GConv.forward
        h2 = jnp.maximum(h2, 0.0)
        h2_ref[...] = h2

        # Per-row-tile partial BatchNorm statistics, masking padded rows.
        row = i * tile_m + jax.lax.broadcasted_iota(jnp.int32, (tile_m, 1), 0)
        valid = (row < n_valid).astype(jnp.float32)
        h2m = h2 * valid
        s = jnp.sum(h2m, axis=0, keepdims=True)
        ss = jnp.sum(h2m * h2m, axis=0, keepdims=True)
        ridx = jax.lax.broadcasted_iota(jnp.int32, stats_ref.shape, 0)
        stats_ref[...] = jnp.where(ridx == 0, s, 0.0) + jnp.where(ridx == 1, ss, 0.0)


def _agg_mlp(a, z, w1, b1, w2, b2, *, n_valid, tile):
    n_pad = a.shape[0]
    f_pad = z.shape[1]
    h_pad = w1.shape[1]
    nt = n_pad // tile

    kernel = functools.partial(_agg_mlp_kernel, n_valid=n_valid, tile_m=tile)
    return pl.pallas_call(
        kernel,
        out_shape=(
            jax.ShapeDtypeStruct((n_pad, h_pad), jnp.float32),     # h2
            jax.ShapeDtypeStruct((nt * 8, h_pad), jnp.float32),    # partial stats
        ),
        grid_spec=pltpu.PrefetchScalarGridSpec(
            num_scalar_prefetch=0,
            grid=(nt, nt),                                   # reduction axis last
            in_specs=[
                pl.BlockSpec((tile, tile), lambda i, k: (i, k)),    # A + I (bf16)
                pl.BlockSpec((tile, f_pad), lambda i, k: (k, 0)),   # z
                pl.BlockSpec((f_pad, h_pad), lambda i, k: (0, 0)),  # w1
                pl.BlockSpec((1, h_pad), lambda i, k: (0, 0)),      # b1
                pl.BlockSpec((h_pad, h_pad), lambda i, k: (0, 0)),  # w2
                pl.BlockSpec((1, h_pad), lambda i, k: (0, 0)),      # b2
            ],
            out_specs=(
                pl.BlockSpec((tile, h_pad), lambda i, k: (i, 0)),   # h2 tile
                pl.BlockSpec((8, h_pad), lambda i, k: (i, 0)),      # stats tile
            ),
            scratch_shapes=[pltpu.VMEM((tile, h_pad), jnp.float32)],
        ),
        compiler_params=pltpu.CompilerParams(
            dimension_semantics=("parallel", "arbitrary"),
            vmem_limit_bytes=32 * 1024 * 1024,
        ),
    )(a, z, w1, b1, w2, b2)


# --------------------- pass 2: BatchNorm affine + global_add_pool -----------

def _bn_pool_kernel(h2_ref, ss_ref, p_ref, z_ref, g_ref):
    i = pl.program_id(0)
    scale = ss_ref[0:1, :]
    shift = ss_ref[1:2, :]
    zbn = h2_ref[...] * scale + shift
    z_ref[...] = zbn

    @pl.when(i == 0)
    def _():
        g_ref[...] = jnp.zeros_like(g_ref)

    # global_add_pool folded into the normalize pass (per-tile segment sum).
    g_ref[...] += jnp.dot(p_ref[...], zbn, preferred_element_type=jnp.float32)


def _bn_pool(h2, ss, p, *, tile):
    n_pad, h_pad = h2.shape
    b_pad = p.shape[0]
    nt = n_pad // tile
    return pl.pallas_call(
        _bn_pool_kernel,
        out_shape=(
            jax.ShapeDtypeStruct((n_pad, h_pad), jnp.float32),  # normalized z
            jax.ShapeDtypeStruct((b_pad, h_pad), jnp.float32),  # pooled g
        ),
        grid_spec=pltpu.PrefetchScalarGridSpec(
            num_scalar_prefetch=0,
            grid=(nt,),
            in_specs=[
                pl.BlockSpec((tile, h_pad), lambda i: (i, 0)),  # h2 tile
                pl.BlockSpec((8, h_pad), lambda i: (0, 0)),     # scale/shift rows
                pl.BlockSpec((b_pad, tile), lambda i: (0, i)),  # pooling matrix tile
            ],
            out_specs=(
                pl.BlockSpec((tile, h_pad), lambda i: (i, 0)),  # z tile
                pl.BlockSpec((b_pad, h_pad), lambda i: (0, 0)),  # g accumulator
            ),
        ),
        compiler_params=pltpu.CompilerParams(
            dimension_semantics=("arbitrary",),
            vmem_limit_bytes=32 * 1024 * 1024,
        ),
    )(h2, ss, p)


# --------------------- per-layer glue ----------------------------------------

@functools.partial(jax.jit, static_argnames=("n_valid", "tile"))
def _gin_layer(a, p, z, w1, b1, w2, b2, gamma, beta, *, n_valid, tile):
    h2, stats_part = _agg_mlp(a, z, w1, b1, w2, b2, n_valid=n_valid, tile=tile)
    nt = a.shape[0] // tile
    h_pad = w1.shape[1]
    stats = stats_part.reshape(nt, 8, h_pad)[:, :2, :].sum(axis=0)
    mean = stats[0] / n_valid
    var = jnp.maximum(stats[1] / n_valid - mean * mean, 0.0)   # biased (training) var
    scale = gamma * jax.lax.rsqrt(var + BN_EPS)
    shift = beta - mean * scale
    ss = jnp.zeros((8, h_pad), jnp.float32).at[0].set(scale).at[1].set(shift)
    return _bn_pool(h2, ss, p, tile=tile)


# --------------------- module-level wrapper ----------------------------------

def init_gconv_params(key, input_dim, hidden_dim, num_layers):
    """PyTorch-style init: Linear U(-1/sqrt(fan_in), 1/sqrt(fan_in)); BN gamma=1, beta=0."""
    params = []
    for i in range(num_layers):
        din = input_dim if i == 0 else hidden_dim
        key, k1, k2, k3, k4 = jax.random.split(key, 5)
        s1 = 1.0 / jnp.sqrt(din)
        s2 = 1.0 / jnp.sqrt(hidden_dim)
        params.append(dict(
            w1=jax.random.uniform(k1, (din, hidden_dim), jnp.float32, -s1, s1),
            b1=jax.random.uniform(k2, (hidden_dim,), jnp.float32, -s1, s1),
            w2=jax.random.uniform(k3, (hidden_dim, hidden_dim), jnp.float32, -s2, s2),
            b2=jax.random.uniform(k4, (hidden_dim,), jnp.float32, -s2, s2),
            gamma=jnp.ones((hidden_dim,), jnp.float32),
            beta=jnp.zeros((hidden_dim,), jnp.float32),
        ))
    return params


def gconv_forward(x, edge_index, batch, params, num_graphs, *, tile=128):
    """Mirrors GConv.forward: returns (z_cat [N, H*L], g_cat [B, H*L])."""
    n, f = x.shape
    hidden = params[0]["w1"].shape[1]
    n_pad = max(_round_up(n, tile), tile)
    f_pad = _round_up(f, LANE)
    h_pad = _round_up(hidden, LANE)
    b_pad = max(_round_up(num_graphs, 8), 8)

    src, dst = edge_index[0], edge_index[1]
    # Dense (A + I): PyG GINConv message src -> dst plus the eps=0 self term.
    a = jnp.zeros((n_pad, n_pad), jnp.float32)
    a = a.at[dst, src].add(1.0)
    diag = jnp.arange(n)
    a = a.at[diag, diag].add(1.0)
    a = a.astype(jnp.bfloat16)  # small-integer multiplicities: exact in bf16

    # Pooling matrix for global_add_pool (padded nodes / graphs stay zero).
    p = jnp.zeros((b_pad, n_pad), jnp.float32).at[batch, jnp.arange(n)].add(1.0)

    z = _pad2d(x.astype(jnp.float32), n_pad, f_pad)
    zs, gs = [], []
    for lp in params:
        din = lp["w1"].shape[0]
        din_pad = _round_up(din, LANE)
        w1 = _pad2d(lp["w1"], din_pad, h_pad)
        b1 = _pad2d(lp["b1"][None, :], 1, h_pad)
        w2 = _pad2d(lp["w2"], h_pad, h_pad)
        b2 = _pad2d(lp["b2"][None, :], 1, h_pad)
        gamma = jnp.pad(lp["gamma"], (0, h_pad - hidden))
        beta = jnp.pad(lp["beta"], (0, h_pad - hidden))
        z, g = _gin_layer(a, p, z, w1, b1, w2, b2, gamma, beta,
                          n_valid=n, tile=tile)
        zs.append(z[:n, :hidden])
        gs.append(g[:num_graphs, :hidden])
    return jnp.concatenate(zs, axis=1), jnp.concatenate(gs, axis=1)


if __name__ == "__main__":
    # Small synthetic graph batch: 2 graphs x 8 nodes each, ring topology.
    num_graphs = 2
    nodes_per_graph = 8
    num_nodes = num_graphs * nodes_per_graph
    input_dim = 8
    hidden_dim = 32
    num_layers = 2

    key = jax.random.PRNGKey(0)
    key, kx = jax.random.split(key)
    x = jax.random.normal(kx, (num_nodes, input_dim), jnp.float32)

    edges = []
    for gi in range(num_graphs):
        base = gi * nodes_per_graph
        for ni in range(nodes_per_graph):
            u = base + ni
            v = base + (ni + 1) % nodes_per_graph
            edges.append((u, v))
            edges.append((v, u))
    edge_index = jnp.array(edges, dtype=jnp.int32).T   # [2, E]
    batch = jnp.repeat(jnp.arange(num_graphs, dtype=jnp.int32), nodes_per_graph)

    params = init_gconv_params(key, input_dim, hidden_dim, num_layers)

    z_out, g_out = gconv_forward(x, edge_index, batch, params, num_graphs)
    jax.block_until_ready((z_out, g_out))

    assert z_out.shape == (num_nodes, hidden_dim * num_layers)
    assert g_out.shape == (num_graphs, hidden_dim * num_layers)
    assert bool(jnp.isfinite(z_out).all()) and bool(jnp.isfinite(g_out).all())
    print("KERNEL_OK")
</pallas_src>

<mosaic_0001>
module attributes {stable_mosaic.version = 11 : i64} {
  func.func @_agg_mlp_kernel(%arg0: i32, %arg1: i32, %arg2: memref<128x128xbf16, #tpu.memory_space<vmem>>, %arg3: memref<128x128xf32, #tpu.memory_space<vmem>>, %arg4: memref<128x128xf32, #tpu.memory_space<vmem>>, %arg5: memref<1x128xf32, #tpu.memory_space<vmem>>, %arg6: memref<128x128xf32, #tpu.memory_space<vmem>>, %arg7: memref<1x128xf32, #tpu.memory_space<vmem>>, %arg8: memref<128x128xf32, #tpu.memory_space<vmem>>, %arg9: memref<8x128xf32, #tpu.memory_space<vmem>>, %arg10: memref<128x128xf32, #tpu.memory_space<vmem>>) attributes {dimension_semantics = [#tpu.dimension_semantics<parallel>, #tpu.dimension_semantics<arbitrary>], iteration_bounds = array<i64: 1, 1>, scalar_prefetch = 0 : i64, scratch_operands = 1 : i64, tpu.core_type = #tpu.core_type<tc>, window_params = [{transform_indices = @transform_0, window_bounds = array<i64: 128, 128>}, {transform_indices = @transform_1, window_bounds = array<i64: 128, 128>}, {pipeline_mode = #tpu.pipeline_mode<synchronous>, transform_indices = @transform_2, window_bounds = array<i64: 128, 128>}, {pipeline_mode = #tpu.pipeline_mode<synchronous>, transform_indices = @transform_3, window_bounds = array<i64: 1, 128>}, {pipeline_mode = #tpu.pipeline_mode<synchronous>, transform_indices = @transform_4, window_bounds = array<i64: 128, 128>}, {pipeline_mode = #tpu.pipeline_mode<synchronous>, transform_indices = @transform_5, window_bounds = array<i64: 1, 128>}, {transform_indices = @transform_6, window_bounds = array<i64: 128, 128>}, {transform_indices = @transform_7, window_bounds = array<i64: 8, 128>}]} {
    %c0_i32 = arith.constant 0 : i32
    %0 = arith.cmpi eq, %arg1, %c0_i32 : i32
    %1 = arith.extui %0 : i1 to i32
    %c0_i32_0 = arith.constant 0 : i32
    %2 = arith.cmpi ne, %1, %c0_i32_0 : i32
    scf.if %2 {
      %cst_10 = arith.constant 0.000000e+00 : f32
      %13 = vector.broadcast %cst_10 : f32 to vector<128x128xf32>
      %c0_11 = arith.constant 0 : index
      %c0_12 = arith.constant 0 : index
      %14 = vector.load %arg10[%c0_11, %c0_12] : memref<128x128xf32, #tpu.memory_space<vmem>>, vector<128x128xf32>
      tpu.vector_store %arg10[%c0_11, %c0_12], %13 {strides = array<i32>} : memref<128x128xf32, #tpu.memory_space<vmem>>, vector<128x128xf32>,
    } else {
    }
    %c0 = arith.constant 0 : index
    %c0_1 = arith.constant 0 : index
    %3 = vector.load %arg2[%c0, %c0_1] : memref<128x128xbf16, #tpu.memory_space<vmem>>, vector<128x128xbf16>
    %4 = arith.extf %3 : vector<128x128xbf16> to vector<128x128xf32>
    %c0_2 = arith.constant 0 : index
    %c0_3 = arith.constant 0 : index
    %5 = vector.load %arg10[%c0_2, %c0_3] : memref<128x128xf32, #tpu.memory_space<vmem>>, vector<128x128xf32>
    %c0_4 = arith.constant 0 : index
    %c0_5 = arith.constant 0 : index
    %6 = vector.load %arg3[%c0_4, %c0_5] : memref<128x128xf32, #tpu.memory_space<vmem>>, vector<128x128xf32>
    %cst = arith.constant dense<0.000000e+00> : vector<128x128xf32>
    %7 = tpu.matmul %4, %6, %cst {dimension_numbers = #tpu.dot_dimension_numbers<[1], [0], [0], [1], [0, 0, 1, 1], [], []>} : vector<128x128xf32>, vector<128x128xf32>, vector<128x128xf32> -> vector<128x128xf32>
    %8 = arith.addf %5, %7 : vector<128x128xf32>
    %c0_6 = arith.constant 0 : index
    %c0_7 = arith.constant 0 : index
    %9 = vector.load %arg10[%c0_6, %c0_7] : memref<128x128xf32, #tpu.memory_space<vmem>>, vector<128x128xf32>
    tpu.vector_store %arg10[%c0_6, %c0_7], %8 {strides = array<i32>} : memref<128x128xf32, #tpu.memory_space<vmem>>, vector<128x128xf32>,
    %c0_i32_8 = arith.constant 0 : i32
    %10 = arith.cmpi eq, %arg1, %c0_i32_8 : i32
    %11 = arith.extui %10 : i1 to i32
    %c0_i32_9 = arith.constant 0 : i32
    %12 = arith.cmpi ne, %11, %c0_i32_9 : i32
    scf.if %12 {
      %c0_10 = arith.constant 0 : index
      %c0_11 = arith.constant 0 : index
      %13 = vector.load %arg10[%c0_10, %c0_11] : memref<128x128xf32, #tpu.memory_space<vmem>>, vector<128x128xf32>
      %c0_12 = arith.constant 0 : index
      %c0_13 = arith.constant 0 : index
      %14 = vector.load %arg4[%c0_12, %c0_13] : memref<128x128xf32, #tpu.memory_space<vmem>>, vector<128x128xf32>
      %cst_14 = arith.constant dense<0.000000e+00> : vector<128x128xf32>
      %15 = tpu.matmul %13, %14, %cst_14 {dimension_numbers = #tpu.dot_dimension_numbers<[1], [0], [0], [1], [0, 0, 1, 1], [], []>} : vector<128x128xf32>, vector<128x128xf32>, vector<128x128xf32> -> vector<128x128xf32>
      %c0_15 = arith.constant 0 : index
      %c0_16 = arith.constant 0 : index
      %16 = vector.load %arg5[%c0_15, %c0_16] : memref<1x128xf32, #tpu.memory_space<vmem>>, vector<1x128xf32>
      %17 = vector.broadcast %16 : vector<1x128xf32> to vector<128x128xf32>
      %18 = arith.addf %15, %17 : vector<128x128xf32>
      %cst_17 = arith.constant 0.000000e+00 : f32
      %19 = vector.broadcast %cst_17 : f32 to vector<128x128xf32>
      %20 = arith.maximumf %18, %19 : vector<128x128xf32>
      %c0_18 = arith.constant 0 : index
      %c0_19 = arith.constant 0 : index
      %21 = vector.load %arg6[%c0_18, %c0_19] : memref<128x128xf32, #tpu.memory_space<vmem>>, vector<128x128xf32>
      %cst_20 = arith.constant dense<0.000000e+00> : vector<128x128xf32>
      %22 = tpu.matmul %20, %21, %cst_20 {dimension_numbers = #tpu.dot_dimension_numbers<[1], [0], [0], [1], [0, 0, 1, 1], [], []>} : vector<128x128xf32>, vector<128x128xf32>, vector<128x128xf32> -> vector<128x128xf32>
      %c0_21 = arith.constant 0 : index
      %c0_22 = arith.constant 0 : index
      %23 = vector.load %arg7[%c0_21, %c0_22] : memref<1x128xf32, #tpu.memory_space<vmem>>, vector<1x128xf32>
      %24 = vector.broadcast %23 : vector<1x128xf32> to vector<128x128xf32>
      %25 = arith.addf %22, %24 : vector<128x128xf32>
      %cst_23 = arith.constant 0.000000e+00 : f32
      %26 = vector.broadcast %cst_23 : f32 to vector<128x128xf32>
      %27 = arith.maximumf %25, %26 : vector<128x128xf32>
      %c0_24 = arith.constant 0 : index
      %c0_25 = arith.constant 0 : index
      %28 = vector.load %arg8[%c0_24, %c0_25] : memref<128x128xf32, #tpu.memory_space<vmem>>, vector<128x128xf32>
      tpu.vector_store %arg8[%c0_24, %c0_25], %27 {strides = array<i32>} : memref<128x128xf32, #tpu.memory_space<vmem>>, vector<128x128xf32>,
      %c128_i32 = arith.constant 128 : i32
      %29 = arith.muli %arg0, %c128_i32 : i32
      %30 = tpu.iota {dimensions = array<i32: 0>} : vector<128x1xi32>
      %31 = vector.broadcast %29 : i32 to vector<128x1xi32>
      %32 = arith.addi %31, %30 : vector<128x1xi32>
      %c16_i32 = arith.constant 16 : i32
      %33 = vector.broadcast %c16_i32 : i32 to vector<128x1xi32>
      %34 = arith.cmpi slt, %32, %33 : vector<128x1xi32>
      %35 = arith.extui %34 : vector<128x1xi1> to vector<128x1xi32>
      %36 = arith.sitofp %35 : vector<128x1xi32> to vector<128x1xf32>
      %37 = vector.broadcast %36 : vector<128x1xf32> to vector<128x128xf32>
      %38 = arith.mulf %27, %37 : vector<128x128xf32>
      %cst_26 = arith.constant dense<0.000000e+00> : vector<128xf32>
      %39 = vector.multi_reduction <add>, %38, %cst_26 [0] : vector<128x128xf32> to vector<128xf32>
      %40 = vector.shape_cast %39 : vector<128xf32> to vector<1x128xf32>
      %41 = arith.mulf %38, %38 : vector<128x128xf32>
      %cst_27 = arith.constant dense<0.000000e+00> : vector<128xf32>
      %42 = vector.multi_reduction <add>, %41, %cst_27 [0] : vector<128x128xf32> to vector<128xf32>
      %43 = vector.shape_cast %42 : vector<128xf32> to vector<1x128xf32>
      %44 = tpu.iota {dimensions = array<i32: 0>} : vector<8x128xi32>
      %c0_i32_28 = arith.constant 0 : i32
      %45 = vector.broadcast %c0_i32_28 : i32 to vector<8x128xi32>
      %46 = arith.cmpi eq, %44, %45 : vector<8x128xi32>
      %cst_29 = arith.constant 0.000000e+00 : f32
      %47 = vector.shape_cast %40 : vector<1x128xf32> to vector<1x128xf32>
      %48 = vector.broadcast %47 : vector<1x128xf32> to vector<8x128xf32>
      %49 = vector.broadcast %cst_29 : f32 to vector<8x128xf32>
      %50 = arith.select %46, %48, %49 : vector<8x128xi1>, vector<8x128xf32>
      %c1_i32 = arith.constant 1 : i32
      %51 = vector.broadcast %c1_i32 : i32 to vector<8x128xi32>
      %52 = arith.cmpi eq, %44, %51 : vector<8x128xi32>
      %cst_30 = arith.constant 0.000000e+00 : f32
      %53 = vector.shape_cast %43 : vector<1x128xf32> to vector<1x128xf32>
      %54 = vector.broadcast %53 : vector<1x128xf32> to vector<8x128xf32>
      %55 = vector.broadcast %cst_30 : f32 to vector<8x128xf32>
      %56 = arith.select %52, %54, %55 : vector<8x128xi1>, vector<8x128xf32>
      %57 = arith.addf %50, %56 : vector<8x128xf32>
      %c0_31 = arith.constant 0 : index
      %c0_32 = arith.constant 0 : index
      %58 = vector.load %arg9[%c0_31, %c0_32] : memref<8x128xf32, #tpu.memory_space<vmem>>, vector<8x128xf32>
      tpu.vector_store %arg9[%c0_31, %c0_32], %57 {strides = array<i32>} : memref<8x128xf32, #tpu.memory_space<vmem>>, vector<8x128xf32>,
    } else {
    }
    return
  }
  func.func @transform_0(%arg0: i32, %arg1: i32) -> (i32, i32) {
    %c0_i32 = arith.constant 0 : i32
    return %arg0, %arg1 : i32, i32
  }
  func.func @transform_1(%arg0: i32, %arg1: i32) -> (i32, i32) {
    %c0_i32 = arith.constant 0 : i32
    %c0_i32_0 = arith.constant 0 : i32
    return %arg1, %c0_i32 : i32, i32
  }
  func.func @transform_2(%arg0: i32, %arg1: i32) -> (i32, i32) {
    %c0_i32 = arith.constant 0 : i32
    %c0_i32_0 = arith.constant 0 : i32
    %c0_i32_1 = arith.constant 0 : i32
    return %c0_i32, %c0_i32_0 : i32, i32
  }
  func.func @transform_3(%arg0: i32, %arg1: i32) -> (i32, i32) {
    %c0_i32 = arith.constant 0 : i32
    %c0_i32_0 = arith.constant 0 : i32
    %c0_i32_1 = arith.constant 0 : i32
    return %c0_i32, %c0_i32_0 : i32, i32
  }
  func.func @transform_4(%arg0: i32, %arg1: i32) -> (i32, i32) {
    %c0_i32 = arith.constant 0 : i32
    %c0_i32_0 = arith.constant 0 : i32
    %c0_i32_1 = arith.constant 0 : i32
    return %c0_i32, %c0_i32_0 : i32, i32
  }
  func.func @transform_5(%arg0: i32, %arg1: i32) -> (i32, i32) {
    %c0_i32 = arith.constant 0 : i32
    %c0_i32_0 = arith.constant 0 : i32
    %c0_i32_1 = arith.constant 0 : i32
    return %c0_i32, %c0_i32_0 : i32, i32
  }
  func.func @transform_6(%arg0: i32, %arg1: i32) -> (i32, i32) {
    %c0_i32 = arith.constant 0 : i32
    %c0_i32_0 = arith.constant 0 : i32
    return %arg0, %c0_i32 : i32, i32
  }
  func.func @transform_7(%arg0: i32, %arg1: i32) -> (i32, i32) {
    %c0_i32 = arith.constant 0 : i32
    %c0_i32_0 = arith.constant 0 : i32
    return %arg0, %c0_i32 : i32, i32
  }
}

module attributes {stable_mosaic.version = 11 : i64} {
  func.func @_bn_pool_kernel(%arg0: i32, %arg1: memref<128x128xf32, #tpu.memory_space<vmem>>, %arg2: memref<8x128xf32, #tpu.memory_space<vmem>>, %arg3: memref<8x128xf32, #tpu.memory_space<vmem>>, %arg4: memref<128x128xf32, #tpu.memory_space<vmem>>, %arg5: memref<8x128xf32, #tpu.memory_space<vmem>>) attributes {dimension_semantics = [#tpu.dimension_semantics<arbitrary>], iteration_bounds = array<i64: 1>, scalar_prefetch = 0 : i64, scratch_operands = 0 : i64, tpu.core_type = #tpu.core_type<tc>, window_params = [{transform_indices = @transform_0, window_bounds = array<i64: 128, 128>}, {pipeline_mode = #tpu.pipeline_mode<synchronous>, transform_indices = @transform_1, window_bounds = array<i64: 8, 128>}, {transform_indices = @transform_2, window_bounds = array<i64: 8, 128>}, {transform_indices = @transform_3, window_bounds = array<i64: 128, 128>}, {pipeline_mode = #tpu.pipeline_mode<synchronous>, transform_indices = @transform_4, window_bounds = array<i64: 8, 128>}]} {
    %c0 = arith.constant 0 : index
    %c0_0 = arith.constant 0 : index
    %0 = vector.load %arg2[%c0, %c0_0] : memref<8x128xf32, #tpu.memory_space<vmem>>, vector<1x128xf32>
    %c1 = arith.constant 1 : index
    %c0_1 = arith.constant 0 : index
    %1 = vector.load %arg2[%c1, %c0_1] : memref<8x128xf32, #tpu.memory_space<vmem>>, vector<1x128xf32>
    %c0_2 = arith.constant 0 : index
    %c0_3 = arith.constant 0 : index
    %2 = vector.load %arg1[%c0_2, %c0_3] : memref<128x128xf32, #tpu.memory_space<vmem>>, vector<128x128xf32>
    %3 = vector.broadcast %0 : vector<1x128xf32> to vector<128x128xf32>
    %4 = arith.mulf %2, %3 : vector<128x128xf32>
    %5 = vector.broadcast %1 : vector<1x128xf32> to vector<128x128xf32>
    %6 = arith.addf %4, %5 : vector<128x128xf32>
    %c0_4 = arith.constant 0 : index
    %c0_5 = arith.constant 0 : index
    %7 = vector.load %arg4[%c0_4, %c0_5] : memref<128x128xf32, #tpu.memory_space<vmem>>, vector<128x128xf32>
    tpu.vector_store %arg4[%c0_4, %c0_5], %6 {strides = array<i32>} : memref<128x128xf32, #tpu.memory_space<vmem>>, vector<128x128xf32>,
    %c0_i32 = arith.constant 0 : i32
    %8 = arith.cmpi eq, %arg0, %c0_i32 : i32
    %9 = arith.extui %8 : i1 to i32
    %c0_i32_6 = arith.constant 0 : i32
    %10 = arith.cmpi ne, %9, %c0_i32_6 : i32
    scf.if %10 {
      %cst_13 = arith.constant 0.000000e+00 : f32
      %16 = vector.broadcast %cst_13 : f32 to vector<8x128xf32>
      %c0_14 = arith.constant 0 : index
      %c0_15 = arith.constant 0 : index
      %17 = vector.load %arg5[%c0_14, %c0_15] : memref<8x128xf32, #tpu.memory_space<vmem>>, vector<8x128xf32>
      tpu.vector_store %arg5[%c0_14, %c0_15], %16 {strides = array<i32>} : memref<8x128xf32, #tpu.memory_space<vmem>>, vector<8x128xf32>,
    } else {
    }
    %c0_7 = arith.constant 0 : index
    %c0_8 = arith.constant 0 : index
    %11 = vector.load %arg5[%c0_7, %c0_8] : memref<8x128xf32, #tpu.memory_space<vmem>>, vector<8x128xf32>
    %c0_9 = arith.constant 0 : index
    %c0_10 = arith.constant 0 : index
    %12 = vector.load %arg3[%c0_9, %c0_10] : memref<8x128xf32, #tpu.memory_space<vmem>>, vector<8x128xf32>
    %cst = arith.constant dense<0.000000e+00> : vector<8x128xf32>
    %13 = tpu.matmul %12, %6, %cst {dimension_numbers = #tpu.dot_dimension_numbers<[1], [0], [0], [1], [0, 0, 1, 1], [], []>} : vector<8x128xf32>, vector<128x128xf32>, vector<8x128xf32> -> vector<8x128xf32>
    %14 = arith.addf %11, %13 : vector<8x128xf32>
    %c0_11 = arith.constant 0 : index
    %c0_12 = arith.constant 0 : index
    %15 = vector.load %arg5[%c0_11, %c0_12] : memref<8x128xf32, #tpu.memory_space<vmem>>, vector<8x128xf32>
    tpu.vector_store %arg5[%c0_11, %c0_12], %14 {strides = array<i32>} : memref<8x128xf32, #tpu.memory_space<vmem>>, vector<8x128xf32>,
    return
  }
  func.func @transform_0(%arg0: i32) -> (i32, i32) {
    %c0_i32 = arith.constant 0 : i32
    %c0_i32_0 = arith.constant 0 : i32
    return %arg0, %c0_i32 : i32, i32
  }
  func.func @transform_1(%arg0: i32) -> (i32, i32) {
    %c0_i32 = arith.constant 0 : i32
    %c0_i32_0 = arith.constant 0 : i32
    %c0_i32_1 = arith.constant 0 : i32
    return %c0_i32, %c0_i32_0 : i32, i32
  }
  func.func @transform_2(%arg0: i32) -> (i32, i32) {
    %c0_i32 = arith.constant 0 : i32
    %c0_i32_0 = arith.constant 0 : i32
    return %c0_i32, %arg0 : i32, i32
  }
  func.func @transform_3(%arg0: i32) -> (i32, i32) {
    %c0_i32 = arith.constant 0 : i32
    %c0_i32_0 = arith.constant 0 : i32
    return %arg0, %c0_i32 : i32, i32
  }
  func.func @transform_4(%arg0: i32) -> (i32, i32) {
    %c0_i32 = arith.constant 0 : i32
    %c0_i32_0 = arith.constant 0 : i32
    %c0_i32_1 = arith.constant 0 : i32
    return %c0_i32, %c0_i32_0 : i32, i32
  }
}

</mosaic_0001>

<llo_original>
// kernel: _gin_layer.3
$region0: #{_gin_layer.3}
  #allocation0 [shape = 'u32[]', space=smem, size = 0x4, offset = 0x4, fixed_abs, tag = 'smem constant byte address 0x4 - core index']
  #allocation1 [shape = 'u32[144,128]{1,0:T(1,128)}', space=vmem, size = 0x12000, scoped, tag = 'internal scratch']
  %s0 = inlined_call_operand.vmem [shape: f32[128,128], index: 0, kind: input, shape index: {}]
  %s1 = inlined_call_operand.vmem [shape: f32[8,128], index: 1, kind: input, shape index: {}]
  %s2 = inlined_call_operand.vmem [shape: f32[8,128], index: 2, kind: input, shape index: {}]
  %s3 = inlined_call_operand.hbm [shape: f32[128,128], index: 3, kind: output, shape index: {0}]
  %s4 = inlined_call_operand.hbm [shape: f32[8,128], index: 4, kind: output, shape index: {1}]
  %5 = xla_tuple %s3, %s4
  %s6 = sld [smem:[#allocation0]]
  $region34: #{_gin_layer.3} parent=0
    _
  %s8 = ssub.s32 1, %s6
  %s9 = scalar_select 0, %s8, %s6
  $region1: #{_gin_layer.3} parent=0
    #allocation2 [shape = 'u8[65536]{0}', space=vmem, size = 0x10000, scoped, tag = 'output window, operand 0, single buffered']
    #allocation3 [shape = 's32[1]{0}', space=sflag, size = 0x4, scoped, tag = 'scoped memory for _gin_layer.3']
    #allocation4 [shape = 'u8[4096]{0}', space=vmem, size = 0x1000, scoped, tag = 'output window, operand 1, single buffered']
    #allocation5 [shape = 's32[1]{0}', space=sflag, size = 0x4, scoped, tag = 'scoped memory for _gin_layer.3']
    %10 = vsyncpa [#allocation3], 0
    %11 = vsyncpa [#allocation5], 0
    // Predicated region
    $region2: #{_gin_layer.3} parent=1 // pred_check
      _
    $region3: #{_gin_layer.3} parent=1 // pred_check_branch
      %13 = sbr.rel (0) target = $region5
    $region4: #{_gin_layer.3} parent=1 // pred_region
      _
    $region5: #{_gin_layer.3} parent=1 // pred_fallthru
      _
    // Predicated region
    $region6: #{_gin_layer.3} parent=1 // pred_check
      _
    $region7: #{_gin_layer.3} parent=1 // pred_check_branch
      %15 = sbr.rel (0) target = $region9
    $region8: #{_gin_layer.3} parent=1 // pred_region
      _
    $region9: #{_gin_layer.3} parent=1 // pred_fallthru
      _
    // Predicated region
    $region10: #{_gin_layer.3} parent=1 // pred_check
      _
    $region11: #{_gin_layer.3} parent=1 // pred_check_branch
      %17 = sbr.rel (0) target = $region13
    $region12: #{_gin_layer.3} parent=1 // pred_region
      _
    $region13: #{_gin_layer.3} parent=1 // pred_fallthru
      _
    %v18 = vld [vmem:[%s1] sm:$0x1]
    %v19 = vld [vmem:[%s1 + $0x1] sm:$0x1]
    %v20 = vld [vmem:[%s0] sm:$0xff]
    %v21 = vld [vmem:[%s0 + $0x8] sm:$0xff]
    %v22 = vld [vmem:[%s0 + $0x10] sm:$0xff]
    %v23 = vld [vmem:[%s0 + $0x18] sm:$0xff]
    %v24 = vld [vmem:[%s0 + $0x20] sm:$0xff]
    %v25 = vld [vmem:[%s0 + $0x28] sm:$0xff]
    %v26 = vld [vmem:[%s0 + $0x30] sm:$0xff]
    %v27 = vld [vmem:[%s0 + $0x38] sm:$0xff]
    %v28 = vld [vmem:[%s0 + $0x40] sm:$0xff]
    %v29 = vld [vmem:[%s0 + $0x48] sm:$0xff]
    %v30 = vld [vmem:[%s0 + $0x50] sm:$0xff]
    %v31 = vld [vmem:[%s0 + $0x58] sm:$0xff]
    %v32 = vld [vmem:[%s0 + $0x60] sm:$0xff]
    %v33 = vld [vmem:[%s0 + $0x68] sm:$0xff]
    %v34 = vld [vmem:[%s0 + $0x70] sm:$0xff]
    %v35 = vld [vmem:[%s0 + $0x78] sm:$0xff]
    %v36 = vlaneseq
    %v37 = vshrl.u32 %v36, 7
    %v38 = vsub.s32 0, %v37
    %v39 = vrot.slane %v18, %v38
    %v40 = vmul.f32 %v20, %v39
    %v41 = vmul.f32 %v21, %v39
    %v42 = vmul.f32 %v22, %v39
    %v43 = vmul.f32 %v23, %v39
    %v44 = vmul.f32 %v24, %v39
    %v45 = vmul.f32 %v25, %v39
    %v46 = vmul.f32 %v26, %v39
    %v47 = vmul.f32 %v27, %v39
    %v48 = vmul.f32 %v28, %v39
    %v49 = vmul.f32 %v29, %v39
    %v50 = vmul.f32 %v30, %v39
    %v51 = vmul.f32 %v31, %v39
    %v52 = vmul.f32 %v32, %v39
    %v53 = vmul.f32 %v33, %v39
    %v54 = vmul.f32 %v34, %v39
    %v55 = vmul.f32 %v35, %v39
    %v56 = vlaneseq
    %v57 = vshrl.u32 %v56, 7
    %v58 = vsub.s32 0, %v57
    %v59 = vrot.slane %v19, %v58
    %v60 = vadd.f32 %v40, %v59
    %v61 = vadd.f32 %v41, %v59
    %v62 = vadd.f32 %v42, %v59
    %v63 = vadd.f32 %v43, %v59
    %v64 = vadd.f32 %v44, %v59
    %v65 = vadd.f32 %v45, %v59
    %v66 = vadd.f32 %v46, %v59
    %v67 = vadd.f32 %v47, %v59
    %v68 = vadd.f32 %v48, %v59
    %v69 = vadd.f32 %v49, %v59
    %v70 = vadd.f32 %v50, %v59
    %v71 = vadd.f32 %v51, %v59
    %v72 = vadd.f32 %v52, %v59
    %v73 = vadd.f32 %v53, %v59
    %v74 = vadd.f32 %v54, %v59
    %v75 = vadd.f32 %v55, %v59
    %76 = vst [vmem:[#allocation2] sm:$0xff] %v60
    %77 = vst [vmem:[#allocation2 + $0x8] sm:$0xff] %v61
    %78 = vst [vmem:[#allocation2 + $0x10] sm:$0xff] %v62
    %79 = vst [vmem:[#allocation2 + $0x18] sm:$0xff] %v63
    %80 = vst [vmem:[#allocation2 + $0x20] sm:$0xff] %v64
    %81 = vst [vmem:[#allocation2 + $0x28] sm:$0xff] %v65
    %82 = vst [vmem:[#allocation2 + $0x30] sm:$0xff] %v66
    %83 = vst [vmem:[#allocation2 + $0x38] sm:$0xff] %v67
    %84 = vst [vmem:[#allocation2 + $0x40] sm:$0xff] %v68
    %85 = vst [vmem:[#allocation2 + $0x48] sm:$0xff] %v69
    %86 = vst [vmem:[#allocation2 + $0x50] sm:$0xff] %v70
    %87 = vst [vmem:[#allocation2 + $0x58] sm:$0xff] %v71
    %88 = vst [vmem:[#allocation2 + $0x60] sm:$0xff] %v72
    %89 = vst [vmem:[#allocation2 + $0x68] sm:$0xff] %v73
    %90 = vst [vmem:[#allocation2 + $0x70] sm:$0xff] %v74
    %91 = vst [vmem:[#allocation2 + $0x78] sm:$0xff] %v75
    %p92 = scmp.eq.s32.totalorder 0, 0
    // Predicated region
    $region14: #{_gin_layer.3} parent=1 // pred_check
      %p93 = pneg %p92
    $region15: #{_gin_layer.3} parent=1 // pred_check_branch
      %95 = sbr.rel (%p93) target = $region17
    $region16: #{_gin_layer.3} parent=1 // pred_region
      %96 = vst [vmem:[#allocation4] sm:$0xff] 0.0
    $region17: #{_gin_layer.3} parent=1 // pred_fallthru
      _
    %v97 = vld [vmem:[#allocation4] sm:$0xff]
    %v98 = vld [vmem:[%s2] sm:$0xff]
    %99 = vmatprep.subr.mxu0 0.0
    %100 = vmatpush1.msra.mxu0 %v60
    %101 = vmatprep.subr.mxu0 0.0
    %102 = vmatpush1.msra.mxu0 %v61
    %103 = vmatprep.subr.mxu0 0.0
    %104 = vmatpush1.msra.mxu0 %v62
    %105 = vmatprep.subr.mxu0 0.0
    %106 = vmatpush1.msra.mxu0 %v63
    %107 = vmatprep.subr.mxu0 0.0
    %108 = vmatpush1.msra.mxu0 %v64
    %109 = vmatprep.subr.mxu0 0.0
    %110 = vmatpush1.msra.mxu0 %v65
    %111 = vmatprep.subr.mxu0 0.0
    %112 = vmatpush1.msra.mxu0 %v66
    %113 = vmatprep.subr.mxu0 0.0
    %114 = vmatpush1.msra.mxu0 %v67
    %115 = vmatprep.subr.mxu0 0.0
    %116 = vmatpush1.msra.mxu0 %v68
    %117 = vmatprep.subr.mxu0 0.0
    %118 = vmatpush1.msra.mxu0 %v69
    %119 = vmatprep.subr.mxu0 0.0
    %120 = vmatpush1.msra.mxu0 %v70
    %121 = vmatprep.subr.mxu0 0.0
    %122 = vmatpush1.msra.mxu0 %v71
    %123 = vmatprep.subr.mxu0 0.0
    %124 = vmatpush1.msra.mxu0 %v72
    %125 = vmatprep.subr.mxu0 0.0
    %126 = vmatpush1.msra.mxu0 %v73
    %127 = vmatprep.subr.mxu0 0.0
    %128 = vmatpush1.msra.mxu0 %v74
    %129 = vmatprep.subr.mxu0 0.0
    %130 = vmatpush1.msra.mxu0 %v75
    %131 = vmatprep.subr.mxu0 0.0
    %132 = vmatpush1.msra.mxu0 0.0
    %133 = vmatprep.subr.mxu0 0.0
    %134 = vmatpush1.msra.mxu0 0.0
    %135 = vmatprep.subr.mxu0 0.0
    %136 = vmatpush1.msra.mxu0 0.0
    %137 = vmatprep.subr.mxu0 0.0
    %138 = vmatpush1.msra.mxu0 0.0
    %139 = vmatprep.subr.mxu0 0.0
    %140 = vmatpush1.msra.mxu0 0.0
    %141 = vmatprep.subr.mxu0 0.0
    %142 = vmatpush1.msra.mxu0 0.0
    %143 = vmatprep.subr.mxu0 0.0
    %144 = vmatpush1.msra.mxu0 0.0
    %145 = vmatprep.subr.mxu0 0.0
    %146 = vmatpush1.msra.mxu0 0.0
    %147 = vmatprep.subr.mxu0 0.0
    %148 = vmatpush1.msra.mxu0 0.0
    %149 = vmatprep.subr.mxu0 0.0
    %150 = vmatpush1.msra.mxu0 0.0
    %151 = vmatprep.subr.mxu0 0.0
    %152 = vmatpush1.msra.mxu0 0.0
    %153 = vmatprep.subr.mxu0 0.0
    %154 = vmatpush1.msra.mxu0 0.0
    %155 = vmatprep.subr.mxu0 0.0
    %156 = vmatpush1.msra.mxu0 0.0
    %157 = vmatprep.subr.mxu0 0.0
    %158 = vmatpush1.msra.mxu0 0.0
    %159 = vmatprep.subr.mxu0 0.0
    %160 = vmatpush1.msra.mxu0 0.0
    %161 = vmatprep.subr.mxu0 0.0
    %162 = vmatpush1.msra.mxu0 0.0
    %163 = vmatprep.mubr.f32.mxu0 0.0
    %164 = vmatmul.mubr.f32.gmra.mrb[0].mxu0 %v98
    %v165 = vpop.f32.mrb[0].mxu0
    %v166 = vadd.f32 0.0, %v165
    %v167 = vpop.f32.mrb[0].mxu0
    %168 = vdwg.mxu0
    %v169 = vadd.f32 %v97, %v166
    %170 = vst [vmem:[#allocation4] sm:$0xff] %v169
    // Predicated region
    $region18: #{_gin_layer.3} parent=1 // pred_check
      _
    $region19: #{_gin_layer.3} parent=1 // pred_check_branch
      %172 = sbr.rel (0) target = $region21
    $region20: #{_gin_layer.3} parent=1 // pred_region
      %s174 = ssub.s32 2048, 2048
      %175 = vsyncadd [#allocation3], %s174
      %s176 = sshll.u32 [#allocation2], 4
      %s177 = int_to_ptr.vmem [resolvable:$true] %s176
      %182 = dma.vmem_to_hbm [thread:$0]  %s177, 2048, %s3, [#allocation3], 128, 128, 8
    $region21: #{_gin_layer.3} parent=1 // pred_fallthru
      _
    // Predicated region
    $region22: #{_gin_layer.3} parent=1 // pred_check
      _
    $region23: #{_gin_layer.3} parent=1 // pred_check_branch
      %184 = sbr.rel (0) target = $region25
    $region24: #{_gin_layer.3} parent=1 // pred_region
      %s186 = ssub.s32 128, 128
      %187 = vsyncadd [#allocation5], %s186
      %s189 = sshll.u32 [#allocation4], 4
      %s190 = int_to_ptr.vmem [resolvable:$true] %s189
      %192 = dma.vmem_to_hbm [thread:$0]  %s190, 128, %s4, [#allocation5]
    $region25: #{_gin_layer.3} parent=1 // pred_fallthru
      _
    // Predicated region
    $region26: #{_gin_layer.3} parent=1 // pred_check
      _
    $region27: #{_gin_layer.3} parent=1 // pred_check_branch
      %194 = sbr.rel (0) target = $region29
    $region28: #{_gin_layer.3} parent=1 // pred_region
      %195 = dma.done [#allocation3], 2048
    $region29: #{_gin_layer.3} parent=1 // pred_fallthru
      _
    // Predicated region
    $region30: #{_gin_layer.3} parent=1 // pred_check
      _
    $region31: #{_gin_layer.3} parent=1 // pred_check_branch
      %197 = sbr.rel (0) target = $region33
    $region32: #{_gin_layer.3} parent=1 // pred_region
      %198 = dma.done [#allocation5], 128
    $region33: #{_gin_layer.3} parent=1 // pred_fallthru
      _
    %199 = vsyncpa [#allocation3], 1
    %200 = vsyncpa [#allocation5], 1

// kernel: _gin_layer.2
$region0: #{_gin_layer.2}
  #allocation0 [shape = 'u32[]', space=smem, size = 0x4, offset = 0x4, fixed_abs, tag = 'smem constant byte address 0x4 - core index']
  #allocation1 [shape = 'u32[144,128]{1,0:T(1,128)}', space=vmem, size = 0x12000, scoped, tag = 'internal scratch']
  #allocation2 [shape = 'f32[128,128]{1,0:T(8,128)}', space=vmem, size = 0x10000, scoped, tag = 'scratch operand']
  %s0 = inlined_call_operand.hbm [shape: bf16[128,128], index: 0, kind: input, shape index: {}]
  %s1 = inlined_call_operand.hbm [shape: f32[128,128], index: 1, kind: input, shape index: {}]
  %s2 = inlined_call_operand.hbm [shape: f32[128,128], index: 2, kind: input, shape index: {}]
  %s3 = inlined_call_operand.vmem [shape: f32[1,128], index: 3, kind: input, shape index: {}]
  %s4 = inlined_call_operand.hbm [shape: f32[128,128], index: 4, kind: input, shape index: {}]
  %s5 = inlined_call_operand.vmem [shape: f32[1,128], index: 5, kind: input, shape index: {}]
  %s6 = inlined_call_operand.vmem [shape: f32[128,128], index: 6, kind: output, shape index: {0}]
  %s7 = inlined_call_operand.vmem [shape: f32[8,128], index: 7, kind: output, shape index: {1}]
  %8 = xla_tuple %s6, %s7
  %s9 = sld [smem:[#allocation0]]
  $region66: #{_gin_layer.2} parent=0
    _
  %s11 = ssub.s32 1, %s9
  %s12 = scalar_select 0, %s11, %s9
  $region1: #{_gin_layer.2} parent=0
    #allocation3 [shape = 'u8[32768]{0}', space=vmem, size = 0x8000, scoped, tag = 'input window, operand 0, single buffered']
    #allocation4 [shape = 's32[1]{0}', space=sflag, size = 0x4, scoped, tag = 'scoped memory for _gin_layer.2']
    #allocation5 [shape = 'u8[65536]{0}', space=vmem, size = 0x10000, scoped, tag = 'input window, operand 1, single buffered']
    #allocation6 [shape = 's32[1]{0}', space=sflag, size = 0x4, scoped, tag = 'scoped memory for _gin_layer.2']
    #allocation7 [shape = 'u8[65536]{0}', space=vmem, size = 0x10000, scoped, tag = 'input window, operand 2, single buffered']
    #allocation8 [shape = 'u8[65536]{0}', space=vmem, size = 0x10000, scoped, tag = 'input window, operand 4, single buffered']
    #allocation9 [shape = 's32[1]{0}', space=sflag, size = 0x4, scoped, tag = 'scoped memory for _gin_layer.2']
    %13 = vsyncpa [#allocation4], 0
    %14 = vsyncpa [#allocation6], 0
    %15 = vsyncpa [#allocation9], 0
    // Predicated region
    $region2: #{_gin_layer.2} parent=1 // pred_check
      _
    $region3: #{_gin_layer.2} parent=1 // pred_check_branch
      %17 = sbr.rel (0) target = $region5
    $region4: #{_gin_layer.2} parent=1 // pred_region
      %s19 = ssub.s32 1024, 1024
      %20 = vsyncadd [#allocation4], %s19
      %s21 = sshll.u32 [#allocation3], 4
      %s22 = int_to_ptr.vmem [resolvable:$true] %s21
      %27 = dma.hbm_to_vmem [thread:$0]  %s0, 1024, %s22, [#allocation4], 64, 64, 4
    $region5: #{_gin_layer.2} parent=1 // pred_fallthru
      _
    // Predicated region
    $region6: #{_gin_layer.2} parent=1 // pred_check
      _
    $region7: #{_gin_layer.2} parent=1 // pred_check_branch
      %29 = sbr.rel (0) target = $region9
    $region8: #{_gin_layer.2} parent=1 // pred_region
      %s31 = ssub.s32 2048, 2048
      %32 = vsyncadd [#allocation6], %s31
      %s33 = sshll.u32 [#allocation5], 4
      %s34 = int_to_ptr.vmem [resolvable:$true] %s33
      %39 = dma.hbm_to_vmem [thread:$0]  %s1, 2048, %s34, [#allocation6], 128, 128, 8
    $region9: #{_gin_layer.2} parent=1 // pred_fallthru
      _
    // Predicated region
    $region10: #{_gin_layer.2} parent=1 // pred_check
      _
    $region11: #{_gin_layer.2} parent=1 // pred_check_branch
      %41 = sbr.rel (0) target = $region13
    $region12: #{_gin_layer.2} parent=1 // pred_region
      %s43 = ssub.s32 2048, 2048
      %44 = vsyncadd [#allocation6], %s43
      %s45 = sshll.u32 [#allocation7], 4
      %s46 = int_to_ptr.vmem [resolvable:$true] %s45
      %51 = dma.hbm_to_vmem [thread:$0]  %s2, 2048, %s46, [#allocation6], 128, 128, 8
    $region13: #{_gin_layer.2} parent=1 // pred_fallthru
      _
    // Predicated region
    $region14: #{_gin_layer.2} parent=1 // pred_check
      _
    $region15: #{_gin_layer.2} parent=1 // pred_check_branch
      %53 = sbr.rel (0) target = $region17
    $region16: #{_gin_layer.2} parent=1 // pred_region
      _
    $region17: #{_gin_layer.2} parent=1 // pred_fallthru
      _
    // Predicated region
    $region18: #{_gin_layer.2} parent=1 // pred_check
      _
    $region19: #{_gin_layer.2} parent=1 // pred_check_branch
      %55 = sbr.rel (0) target = $region21
    $region20: #{_gin_layer.2} parent=1 // pred_region
      %s57 = ssub.s32 2048, 2048
      %58 = vsyncadd [#allocation9], %s57
      %s59 = sshll.u32 [#allocation8], 4
      %s60 = int_to_ptr.vmem [resolvable:$true] %s59
      %65 = dma.hbm_to_vmem [thread:$0]  %s4, 2048, %s60, [#allocation9], 128, 128, 8
    $region21: #{_gin_layer.2} parent=1 // pred_fallthru
      _
    // Predicated region
    $region22: #{_gin_layer.2} parent=1 // pred_check
      _
    $region23: #{_gin_layer.2} parent=1 // pred_check_branch
      %67 = sbr.rel (0) target = $region25
    $region24: #{_gin_layer.2} parent=1 // pred_region
      _
    $region25: #{_gin_layer.2} parent=1 // pred_fallthru
      _
    // Predicated region
    $region26: #{_gin_layer.2} parent=1 // pred_check
      _
    $region27: #{_gin_layer.2} parent=1 // pred_check_branch
      %69 = sbr.rel (0) target = $region29
    $region28: #{_gin_layer.2} parent=1 // pred_region
      %70 = dma.done [#allocation4], 1024
    $region29: #{_gin_layer.2} parent=1 // pred_fallthru
      _
    // Predicated region
    $region30: #{_gin_layer.2} parent=1 // pred_check
      _
    $region31: #{_gin_layer.2} parent=1 // pred_check_branch
      %72 = sbr.rel (0) target = $region33
    $region32: #{_gin_layer.2} parent=1 // pred_region
      %73 = dma.done [#allocation6], 2048
    $region33: #{_gin_layer.2} parent=1 // pred_fallthru
      _
    // Predicated region
    $region34: #{_gin_layer.2} parent=1 // pred_check
      _
    $region35: #{_gin_layer.2} parent=1 // pred_check_branch
      %75 = sbr.rel (0) target = $region37
    $region36: #{_gin_layer.2} parent=1 // pred_region
      %76 = dma.done [#allocation6], 2048
    $region37: #{_gin_layer.2} parent=1 // pred_fallthru
      _
    // Predicated region
    $region38: #{_gin_layer.2} parent=1 // pred_check
      _
    $region39: #{_gin_layer.2} parent=1 // pred_check_branch
      %78 = sbr.rel (0) target = $region41
    $region40: #{_gin_layer.2} parent=1 // pred_region
      %79 = dma.done [#allocation9], 2048
    $region41: #{_gin_layer.2} parent=1 // pred_fallthru
      _
    %p80 = scmp.eq.s32.totalorder 0, 0
    // Predicated region
    $region42: #{_gin_layer.2} parent=1 // pred_check
      %p81 = pneg %p80
    $region43: #{_gin_layer.2} parent=1 // pred_check_branch
      %83 = sbr.rel (%p81) target = $region45
    $region44: #{_gin_layer.2} parent=1 // pred_region
      %84 = vst [vmem:[#allocation2] sm:$0xff] 0.0
      %85 = vst [vmem:[#allocation2 + $0x8] sm:$0xff] 0.0
      %86 = vst [vmem:[#allocation2 + $0x10] sm:$0xff] 0.0
      %87 = vst [vmem:[#allocation2 + $0x18] sm:$0xff] 0.0
      %88 = vst [vmem:[#allocation2 + $0x20] sm:$0xff] 0.0
      %89 = vst [vmem:[#allocation2 + $0x28] sm:$0xff] 0.0
      %90 = vst [vmem:[#allocation2 + $0x30] sm:$0xff] 0.0
      %91 = vst [vmem:[#allocation2 + $0x38] sm:$0xff] 0.0
      %92 = vst [vmem:[#allocation2 + $0x40] sm:$0xff] 0.0
      %93 = vst [vmem:[#allocation2 + $0x48] sm:$0xff] 0.0
      %94 = vst [vmem:[#allocation2 + $0x50] sm:$0xff] 0.0
      %95 = vst [vmem:[#allocation2 + $0x58] sm:$0xff] 0.0
      %96 = vst [vmem:[#allocation2 + $0x60] sm:$0xff] 0.0
      %97 = vst [vmem:[#allocation2 + $0x68] sm:$0xff] 0.0
      %98 = vst [vmem:[#allocation2 + $0x70] sm:$0xff] 0.0
      %99 = vst [vmem:[#allocation2 + $0x78] sm:$0xff] 0.0
    $region45: #{_gin_layer.2} parent=1 // pred_fallthru
      _
    %v100 = vld [vmem:[#allocation3] sm:$0xf]
    %v101 = vld [vmem:[#allocation3 + $0x4] sm:$0xf]
    %v102 = vld [vmem:[#allocation3 + $0x8] sm:$0xf]
    %v103 = vld [vmem:[#allocation3 + $0xc] sm:$0xf]
    %v104 = vld [vmem:[#allocation3 + $0x10] sm:$0xf]
    %v105 = vld [vmem:[#allocation3 + $0x14] sm:$0xf]
    %v106 = vld [vmem:[#allocation3 + $0x18] sm:$0xf]
    %v107 = vld [vmem:[#allocation3 + $0x1c] sm:$0xf]
    %v108 = vld [vmem:[#allocation3 + $0x20] sm:$0xf]
    %v109 = vld [vmem:[#allocation3 + $0x24] sm:$0xf]
    %v110 = vld [vmem:[#allocation3 + $0x28] sm:$0xf]
    %v111 = vld [vmem:[#allocation3 + $0x2c] sm:$0xf]
    %v112 = vld [vmem:[#allocation3 + $0x30] sm:$0xf]
    %v113 = vld [vmem:[#allocation3 + $0x34] sm:$0xf]
    %v114 = vld [vmem:[#allocation3 + $0x38] sm:$0xf]
    %v115 = vld [vmem:[#allocation3 + $0x3c] sm:$0xf]
    %v116 = vunpack.c.l.bf16 %v100
    %v117 = vunpack.c.l.bf16 %v101
    %v118 = vunpack.c.l.bf16 %v102
    %v119 = vunpack.c.l.bf16 %v103
    %v120 = vunpack.c.l.bf16 %v104
    %v121 = vunpack.c.l.bf16 %v105
    %v122 = vunpack.c.l.bf16 %v106
    %v123 = vunpack.c.l.bf16 %v107
    %v124 = vunpack.c.l.bf16 %v108
    %v125 = vunpack.c.l.bf16 %v109
    %v126 = vunpack.c.l.bf16 %v110
    %v127 = vunpack.c.l.bf16 %v111
    %v128 = vunpack.c.l.bf16 %v112
    %v129 = vunpack.c.l.bf16 %v113
    %v130 = vunpack.c.l.bf16 %v114
    %v131 = vunpack.c.l.bf16 %v115
    %v132 = vld [vmem:[#allocation2] sm:$0xff]
    %v133 = vld [vmem:[#allocation2 + $0x8] sm:$0xff]
    %v134 = vld [vmem:[#allocation2 + $0x10] sm:$0xff]
    %v135 = vld [vmem:[#allocation2 + $0x18] sm:$0xff]
    %v136 = vld [vmem:[#allocation2 + $0x20] sm:$0xff]
    %v137 = vld [vmem:[#allocation2 + $0x28] sm:$0xff]
    %v138 = vld [vmem:[#allocation2 + $0x30] sm:$0xff]
    %v139 = vld [vmem:[#allocation2 + $0x38] sm:$0xff]
    %v140 = vld [vmem:[#allocation2 + $0x40] sm:$0xff]
    %v141 = vld [vmem:[#allocation2 + $0x48] sm:$0xff]
    %v142 = vld [vmem:[#allocation2 + $0x50] sm:$0xff]
    %v143 = vld [vmem:[#allocation2 + $0x58] sm:$0xff]
    %v144 = vld [vmem:[#allocation2 + $0x60] sm:$0xff]
    %v145 = vld [vmem:[#allocation2 + $0x68] sm:$0xff]
    %v146 = vld [vmem:[#allocation2 + $0x70] sm:$0xff]
    %v147 = vld [vmem:[#allocation2 + $0x78] sm:$0xff]
    %v148 = vld [vmem:[#allocation5] sm:$0xff]
    %v149 = vld [vmem:[#allocation5 + $0x8] sm:$0xff]
    %v150 = vld [vmem:[#allocation5 + $0x10] sm:$0xff]
    %v151 = vld [vmem:[#allocation5 + $0x18] sm:$0xff]
    %v152 = vld [vmem:[#allocation5 + $0x20] sm:$0xff]
    %v153 = vld [vmem:[#allocation5 + $0x28] sm:$0xff]
    %v154 = vld [vmem:[#allocation5 + $0x30] sm:$0xff]
    %v155 = vld [vmem:[#allocation5 + $0x38] sm:$0xff]
    %v156 = vld [vmem:[#allocation5 + $0x40] sm:$0xff]
    %v157 = vld [vmem:[#allocation5 + $0x48] sm:$0xff]
    %v158 = vld [vmem:[#allocation5 + $0x50] sm:$0xff]
    %v159 = vld [vmem:[#allocation5 + $0x58] sm:$0xff]
    %v160 = vld [vmem:[#allocation5 + $0x60] sm:$0xff]
    %v161 = vld [vmem:[#allocation5 + $0x68] sm:$0xff]
    %v162 = vld [vmem:[#allocation5 + $0x70] sm:$0xff]
    %v163 = vld [vmem:[#allocation5 + $0x78] sm:$0xff]
    %164 = vmatprep.subr.mxu0 0.0
    %165 = vmatpush1.msra.mxu0 %v148
    %166 = vmatprep.subr.mxu0 0.0
    %167 = vmatpush1.msra.mxu0 %v149
    %168 = vmatprep.subr.mxu0 0.0
    %169 = vmatpush1.msra.mxu0 %v150
    %170 = vmatprep.subr.mxu0 0.0
    %171 = vmatpush1.msra.mxu0 %v151
    %172 = vmatprep.subr.mxu0 0.0
    %173 = vmatpush1.msra.mxu0 %v152
    %174 = vmatprep.subr.mxu0 0.0
    %175 = vmatpush1.msra.mxu0 %v153
    %176 = vmatprep.subr.mxu0 0.0
    %177 = vmatpush1.msra.mxu0 %v154
    %178 = vmatprep.subr.mxu0 0.0
    %179 = vmatpush1.msra.mxu0 %v155
    %180 = vmatprep.subr.mxu0 0.0
    %181 = vmatpush1.msra.mxu0 %v156
    %182 = vmatprep.subr.mxu0 0.0
    %183 = vmatpush1.msra.mxu0 %v157
    %184 = vmatprep.subr.mxu0 0.0
    %185 = vmatpush1.msra.mxu0 %v158
    %186 = vmatprep.subr.mxu0 0.0
    %187 = vmatpush1.msra.mxu0 %v159
    %188 = vmatprep.subr.mxu0 0.0
    %189 = vmatpush1.msra.mxu0 %v160
    %190 = vmatprep.subr.mxu0 0.0
    %191 = vmatpush1.msra.mxu0 %v161
    %192 = vmatprep.subr.mxu0 0.0
    %193 = vmatpush1.msra.mxu0 %v162
    %194 = vmatprep.subr.mxu0 0.0
    %195 = vmatpush1.msra.mxu0 %v163
    %196 = vmatprep.subr.mxu0 0.0
    %197 = vmatpush1.msra.mxu0 0.0
    %198 = vmatprep.subr.mxu0 0.0
    %199 = vmatpush1.msra.mxu0 0.0
    %200 = vmatprep.subr.mxu0 0.0
    %201 = vmatpush1.msra.mxu0 0.0
    %202 = vmatprep.subr.mxu0 0.0
    %203 = vmatpush1.msra.mxu0 0.0
    %204 = vmatprep.subr.mxu0 0.0
    %205 = vmatpush1.msra.mxu0 0.0
    %206 = vmatprep.subr.mxu0 0.0
    %207 = vmatpush1.msra.mxu0 0.0
    %208 = vmatprep.subr.mxu0 0.0
    %209 = vmatpush1.msra.mxu0 0.0
    %210 = vmatprep.subr.mxu0 0.0
    %211 = vmatpush1.msra.mxu0 0.0
    %212 = vmatprep.subr.mxu0 0.0
    %213 = vmatpush1.msra.mxu0 0.0
    %214 = vmatprep.subr.mxu0 0.0
    %215 = vmatpush1.msra.mxu0 0.0
    %216 = vmatprep.subr.mxu0 0.0
    %217 = vmatpush1.msra.mxu0 0.0
    %218 = vmatprep.subr.mxu0 0.0
    %219 = vmatpush1.msra.mxu0 0.0
    %220 = vmatprep.subr.mxu0 0.0
    %221 = vmatpush1.msra.mxu0 0.0
    %222 = vmatprep.subr.mxu0 0.0
    %223 = vmatpush1.msra.mxu0 0.0
    %224 = vmatprep.subr.mxu0 0.0
    %225 = vmatpush1.msra.mxu0 0.0
    %226 = vmatprep.subr.mxu0 0.0
    %227 = vmatpush1.msra.mxu0 0.0
    %228 = vmatprep.mubr.f32.mxu0 0.0
    %229 = vmatmul.mubr.f32.gmra.mrb[0].mxu0 %v116
    %v230 = vpop.f32.mrb[0].mxu0
    %v231 = vadd.f32 0.0, %v230
    %v232 = vpop.f32.mrb[0].mxu0
    %233 = vmatprep.mubr.f32.mxu0 0.0
    %234 = vmatmul.mubr.f32.gmra.mrb[0].mxu0 %v117
    %v235 = vpop.f32.mrb[0].mxu0
    %v236 = vadd.f32 0.0, %v235
    %v237 = vpop.f32.mrb[0].mxu0
    %238 = vmatprep.mubr.f32.mxu0 0.0
    %239 = vmatmul.mubr.f32.gmra.mrb[0].mxu0 %v118
    %v240 = vpop.f32.mrb[0].mxu0
    %v241 = vadd.f32 0.0, %v240
    %v242 = vpop.f32.mrb[0].mxu0
    %243 = vmatprep.mubr.f32.mxu0 0.0
    %244 = vmatmul.mubr.f32.gmra.mrb[0].mxu0 %v119
    %v245 = vpop.f32.mrb[0].mxu0
    %v246 = vadd.f32 0.0, %v245
    %v247 = vpop.f32.mrb[0].mxu0
    %248 = vmatprep.mubr.f32.mxu0 0.0
    %249 = vmatmul.mubr.f32.gmra.mrb[0].mxu0 %v120
    %v250 = vpop.f32.mrb[0].mxu0
    %v251 = vadd.f32 0.0, %v250
    %v252 = vpop.f32.mrb[0].mxu0
    %253 = vmatprep.mubr.f32.mxu0 0.0
    %254 = vmatmul.mubr.f32.gmra.mrb[0].mxu0 %v121
    %v255 = vpop.f32.mrb[0].mxu0
    %v256 = vadd.f32 0.0, %v255
    %v257 = vpop.f32.mrb[0].mxu0
    %258 = vmatprep.mubr.f32.mxu0 0.0
    %259 = vmatmul.mubr.f32.gmra.mrb[0].mxu0 %v122
    %v260 = vpop.f32.mrb[0].mxu0
    %v261 = vadd.f32 0.0, %v260
    %v262 = vpop.f32.mrb[0].mxu0
    %263 = vmatprep.mubr.f32.mxu0 0.0
    %264 = vmatmul.mubr.f32.gmra.mrb[0].mxu0 %v123
    %v265 = vpop.f32.mrb[0].mxu0
    %v266 = vadd.f32 0.0, %v265
    %v267 = vpop.f32.mrb[0].mxu0
    %268 = vmatprep.mubr.f32.mxu0 0.0
    %269 = vmatmul.mubr.f32.gmra.mrb[0].mxu0 %v124
    %v270 = vpop.f32.mrb[0].mxu0
    %v271 = vadd.f32 0.0, %v270
    %v272 = vpop.f32.mrb[0].mxu0
    %273 = vmatprep.mubr.f32.mxu0 0.0
    %274 = vmatmul.mubr.f32.gmra.mrb[0].mxu0 %v125
    %v275 = vpop.f32.mrb[0].mxu0
    %v276 = vadd.f32 0.0, %v275
    %v277 = vpop.f32.mrb[0].mxu0
    %278 = vmatprep.mubr.f32.mxu0 0.0
    %279 = vmatmul.mubr.f32.gmra.mrb[0].mxu0 %v126
    %v280 = vpop.f32.mrb[0].mxu0
    %v281 = vadd.f32 0.0, %v280
    %v282 = vpop.f32.mrb[0].mxu0
    %283 = vmatprep.mubr.f32.mxu0 0.0
    %284 = vmatmul.mubr.f32.gmra.mrb[0].mxu0 %v127
    %v285 = vpop.f32.mrb[0].mxu0
    %v286 = vadd.f32 0.0, %v285
    %v287 = vpop.f32.mrb[0].mxu0
    %288 = vmatprep.mubr.f32.mxu0 0.0
    %289 = vmatmul.mubr.f32.gmra.mrb[0].mxu0 %v128
    %v290 = vpop.f32.mrb[0].mxu0
    %v291 = vadd.f32 0.0, %v290
    %v292 = vpop.f32.mrb[0].mxu0
    %293 = vmatprep.mubr.f32.mxu0 0.0
    %294 = vmatmul.mubr.f32.gmra.mrb[0].mxu0 %v129
    %v295 = vpop.f32.mrb[0].mxu0
    %v296 = vadd.f32 0.0, %v295
    %v297 = vpop.f32.mrb[0].mxu0
    %298 = vmatprep.mubr.f32.mxu0 0.0
    %299 = vmatmul.mubr.f32.gmra.mrb[0].mxu0 %v130
    %v300 = vpop.f32.mrb[0].mxu0
    %v301 = vadd.f32 0.0, %v300
    %v302 = vpop.f32.mrb[0].mxu0
    %303 = vmatprep.mubr.f32.mxu0 0.0
    %304 = vmatmul.mubr.f32.gmra.mrb[0].mxu0 %v131
    %v305 = vpop.f32.mrb[0].mxu0
    %v306 = vadd.f32 0.0, %v305
    %v307 = vpop.f32.mrb[0].mxu0
    %308 = vdwg.mxu0
    %v309 = vadd.f32 %v132, %v231
    %v310 = vadd.f32 %v133, %v236
    %v311 = vadd.f32 %v134, %v241
    %v312 = vadd.f32 %v135, %v246
    %v313 = vadd.f32 %v136, %v251
    %v314 = vadd.f32 %v137, %v256
    %v315 = vadd.f32 %v138, %v261
    %v316 = vadd.f32 %v139, %v266
    %v317 = vadd.f32 %v140, %v271
    %v318 = vadd.f32 %v141, %v276
    %v319 = vadd.f32 %v142, %v281
    %v320 = vadd.f32 %v143, %v286
    %v321 = vadd.f32 %v144, %v291
    %v322 = vadd.f32 %v145, %v296
    %v323 = vadd.f32 %v146, %v301
    %v324 = vadd.f32 %v147, %v306
    %325 = vst [vmem:[#allocation2] sm:$0xff] %v309
    %326 = vst [vmem:[#allocation2 + $0x8] sm:$0xff] %v310
    %327 = vst [vmem:[#allocation2 + $0x10] sm:$0xff] %v311
    %328 = vst [vmem:[#allocation2 + $0x18] sm:$0xff] %v312
    %329 = vst [vmem:[#allocation2 + $0x20] sm:$0xff] %v313
    %330 = vst [vmem:[#allocation2 + $0x28] sm:$0xff] %v314
    %331 = vst [vmem:[#allocation2 + $0x30] sm:$0xff] %v315
    %332 = vst [vmem:[#allocation2 + $0x38] sm:$0xff] %v316
    %333 = vst [vmem:[#allocation2 + $0x40] sm:$0xff] %v317
    %334 = vst [vmem:[#allocation2 + $0x48] sm:$0xff] %v318
    %335 = vst [vmem:[#allocation2 + $0x50] sm:$0xff] %v319
    %336 = vst [vmem:[#allocation2 + $0x58] sm:$0xff] %v320
    %337 = vst [vmem:[#allocation2 + $0x60] sm:$0xff] %v321
    %338 = vst [vmem:[#allocation2 + $0x68] sm:$0xff] %v322
    %339 = vst [vmem:[#allocation2 + $0x70] sm:$0xff] %v323
    %340 = vst [vmem:[#allocation2 + $0x78] sm:$0xff] %v324
    // Predicated region
    $region46: #{_gin_layer.2} parent=1 // pred_check
      %p341 = pneg %p80
    $region47: #{_gin_layer.2} parent=1 // pred_check_branch
      %343 = sbr.rel (%p341) target = $region49
    $region48: #{_gin_layer.2} parent=1 // pred_region
      %v344 = vld [vmem:[#allocation2] sm:$0xff]
      %v345 = vld [vmem:[#allocation2 + $0x8] sm:$0xff]
      %v346 = vld [vmem:[#allocation2 + $0x10] sm:$0xff]
      %v347 = vld [vmem:[#allocation2 + $0x18] sm:$0xff]
      %v348 = vld [vmem:[#allocation2 + $0x20] sm:$0xff]
      %v349 = vld [vmem:[#allocation2 + $0x28] sm:$0xff]
      %v350 = vld [vmem:[#allocation2 + $0x30] sm:$0xff]
      %v351 = vld [vmem:[#allocation2 + $0x38] sm:$0xff]
      %v352 = vld [vmem:[#allocation2 + $0x40] sm:$0xff]
      %v353 = vld [vmem:[#allocation2 + $0x48] sm:$0xff]
      %v354 = vld [vmem:[#allocation2 + $0x50] sm:$0xff]
      %v355 = vld [vmem:[#allocation2 + $0x58] sm:$0xff]
      %v356 = vld [vmem:[#allocation2 + $0x60] sm:$0xff]
      %v357 = vld [vmem:[#allocation2 + $0x68] sm:$0xff]
      %v358 = vld [vmem:[#allocation2 + $0x70] sm:$0xff]
      %v359 = vld [vmem:[#allocation2 + $0x78] sm:$0xff]
      %v360 = vld [vmem:[#allocation7] sm:$0xff]
      %v361 = vld [vmem:[#allocation7 + $0x8] sm:$0xff]
      %v362 = vld [vmem:[#allocation7 + $0x10] sm:$0xff]
      %v363 = vld [vmem:[#allocation7 + $0x18] sm:$0xff]
      %v364 = vld [vmem:[#allocation7 + $0x20] sm:$0xff]
      %v365 = vld [vmem:[#allocation7 + $0x28] sm:$0xff]
      %v366 = vld [vmem:[#allocation7 + $0x30] sm:$0xff]
      %v367 = vld [vmem:[#allocation7 + $0x38] sm:$0xff]
      %v368 = vld [vmem:[#allocation7 + $0x40] sm:$0xff]
      %v369 = vld [vmem:[#allocation7 + $0x48] sm:$0xff]
      %v370 = vld [vmem:[#allocation7 + $0x50] sm:$0xff]
      %v371 = vld [vmem:[#allocation7 + $0x58] sm:$0xff]
      %v372 = vld [vmem:[#allocation7 + $0x60] sm:$0xff]
      %v373 = vld [vmem:[#allocation7 + $0x68] sm:$0xff]
      %v374 = vld [vmem:[#allocation7 + $0x70] sm:$0xff]
      %v375 = vld [vmem:[#allocation7 + $0x78] sm:$0xff]
      %v376 = vld [vmem:[%s3] sm:$0x1]
      %v378 = vlaneseq
      %v379 = vshrl.u32 %v378, 7
      %v380 = vsub.s32 0, %v379
      %v381 = vrot.slane %v376, %v380
      %383 = vmatprep.subr.mxu0 0.0
      %384 = vmatpush1.msra.mxu0 %v360
      %385 = vmatprep.subr.mxu0 0.0
      %386 = vmatpush1.msra.mxu0 %v361
      %387 = vmatprep.subr.mxu0 0.0
      %388 = vmatpush1.msra.mxu0 %v362
      %389 = vmatprep.subr.mxu0 0.0
      %390 = vmatpush1.msra.mxu0 %v363
      %391 = vmatprep.subr.mxu0 0.0
      %392 = vmatpush1.msra.mxu0 %v364
      %393 = vmatprep.subr.mxu0 0.0
      %394 = vmatpush1.msra.mxu0 %v365
      %395 = vmatprep.subr.mxu0 0.0
      %396 = vmatpush1.msra.mxu0 %v366
      %397 = vmatprep.subr.mxu0 0.0
      %398 = vmatpush1.msra.mxu0 %v367
      %399 = vmatprep.subr.mxu0 0.0
      %400 = vmatpush1.msra.mxu0 %v368
      %401 = vmatprep.subr.mxu0 0.0
      %402 = vmatpush1.msra.mxu0 %v369
      %403 = vmatprep.subr.mxu0 0.0
      %404 = vmatpush1.msra.mxu0 %v370
      %405 = vmatprep.subr.mxu0 0.0
      %406 = vmatpush1.msra.mxu0 %v371
      %407 = vmatprep.subr.mxu0 0.0
      %408 = vmatpush1.msra.mxu0 %v372
      %409 = vmatprep.subr.mxu0 0.0
      %410 = vmatpush1.msra.mxu0 %v373
      %411 = vmatprep.subr.mxu0 0.0
      %412 = vmatpush1.msra.mxu0 %v374
      %413 = vmatprep.subr.mxu0 0.0
      %414 = vmatpush1.msra.mxu0 %v375
      %415 = vmatprep.subr.mxu0 0.0
      %416 = vmatpush1.msra.mxu0 0.0
      %417 = vmatprep.subr.mxu0 0.0
      %418 = vmatpush1.msra.mxu0 0.0
      %419 = vmatprep.subr.mxu0 0.0
      %420 = vmatpush1.msra.mxu0 0.0
      %421 = vmatprep.subr.mxu0 0.0
      %422 = vmatpush1.msra.mxu0 0.0
      %423 = vmatprep.subr.mxu0 0.0
      %424 = vmatpush1.msra.mxu0 0.0
      %425 = vmatprep.subr.mxu0 0.0
      %426 = vmatpush1.msra.mxu0 0.0
      %427 = vmatprep.subr.mxu0 0.0
      %428 = vmatpush1.msra.mxu0 0.0
      %429 = vmatprep.subr.mxu0 0.0
      %430 = vmatpush1.msra.mxu0 0.0
      %431 = vmatprep.subr.mxu0 0.0
      %432 = vmatpush1.msra.mxu0 0.0
      %433 = vmatprep.subr.mxu0 0.0
      %434 = vmatpush1.msra.mxu0 0.0
      %435 = vmatprep.subr.mxu0 0.0
      %436 = vmatpush1.msra.mxu0 0.0
      %437 = vmatprep.subr.mxu0 0.0
      %438 = vmatpush1.msra.mxu0 0.0
      %439 = vmatprep.subr.mxu0 0.0
      %440 = vmatpush1.msra.mxu0 0.0
      %441 = vmatprep.subr.mxu0 0.0
      %442 = vmatpush1.msra.mxu0 0.0
      %443 = vmatprep.subr.mxu0 0.0
      %444 = vmatpush1.msra.mxu0 0.0
      %445 = vmatprep.subr.mxu0 0.0
      %446 = vmatpush1.msra.mxu0 0.0
      %447 = vmatprep.mubr.f32.mxu0 0.0
      %448 = vmatmul.mubr.f32.gmra.mrb[0].mxu0 %v344
      %v449 = vpop.f32.mrb[0].mxu0
      %v450 = vadd.f32 %v381, %v449
      %v451 = vpop.f32.mrb[0].mxu0
      %452 = vmatprep.mubr.f32.mxu0 0.0
      %453 = vmatmul.mubr.f32.gmra.mrb[0].mxu0 %v345
      %v454 = vpop.f32.mrb[0].mxu0
      %v455 = vadd.f32 %v381, %v454
      %v456 = vpop.f32.mrb[0].mxu0
      %457 = vmatprep.mubr.f32.mxu0 0.0
      %458 = vmatmul.mubr.f32.gmra.mrb[0].mxu0 %v346
      %v459 = vpop.f32.mrb[0].mxu0
      %v460 = vadd.f32 %v381, %v459
      %v461 = vpop.f32.mrb[0].mxu0
      %462 = vmatprep.mubr.f32.mxu0 0.0
      %463 = vmatmul.mubr.f32.gmra.mrb[0].mxu0 %v347
      %v464 = vpop.f32.mrb[0].mxu0
      %v465 = vadd.f32 %v381, %v464
      %v466 = vpop.f32.mrb[0].mxu0
      %467 = vmatprep.mubr.f32.mxu0 0.0
      %468 = vmatmul.mubr.f32.gmra.mrb[0].mxu0 %v348
      %v469 = vpop.f32.mrb[0].mxu0
      %v470 = vadd.f32 %v381, %v469
      %v471 = vpop.f32.mrb[0].mxu0
      %472 = vmatprep.mubr.f32.mxu0 0.0
      %473 = vmatmul.mubr.f32.gmra.mrb[0].mxu0 %v349
      %v474 = vpop.f32.mrb[0].mxu0
      %v475 = vadd.f32 %v381, %v474
      %v476 = vpop.f32.mrb[0].mxu0
      %477 = vmatprep.mubr.f32.mxu0 0.0
      %478 = vmatmul.mubr.f32.gmra.mrb[0].mxu0 %v350
      %v479 = vpop.f32.mrb[0].mxu0
      %v480 = vadd.f32 %v381, %v479
      %v481 = vpop.f32.mrb[0].mxu0
      %482 = vmatprep.mubr.f32.mxu0 0.0
      %483 = vmatmul.mubr.f32.gmra.mrb[0].mxu0 %v351
      %v484 = vpop.f32.mrb[0].mxu0
      %v485 = vadd.f32 %v381, %v484
      %v486 = vpop.f32.mrb[0].mxu0
      %487 = vmatprep.mubr.f32.mxu0 0.0
      %488 = vmatmul.mubr.f32.gmra.mrb[0].mxu0 %v352
      %v489 = vpop.f32.mrb[0].mxu0
      %v490 = vadd.f32 %v381, %v489
      %v491 = vpop.f32.mrb[0].mxu0
      %492 = vmatprep.mubr.f32.mxu0 0.0
      %493 = vmatmul.mubr.f32.gmra.mrb[0].mxu0 %v353
      %v494 = vpop.f32.mrb[0].mxu0
      %v495 = vadd.f32 %v381, %v494
      %v496 = vpop.f32.mrb[0].mxu0
      %497 = vmatprep.mubr.f32.mxu0 0.0
      %498 = vmatmul.mubr.f32.gmra.mrb[0].mxu0 %v354
      %v499 = vpop.f32.mrb[0].mxu0
      %v500 = vadd.f32 %v381, %v499
      %v501 = vpop.f32.mrb[0].mxu0
      %502 = vmatprep.mubr.f32.mxu0 0.0
      %503 = vmatmul.mubr.f32.gmra.mrb[0].mxu0 %v355
      %v504 = vpop.f32.mrb[0].mxu0
      %v505 = vadd.f32 %v381, %v504
      %v506 = vpop.f32.mrb[0].mxu0
      %507 = vmatprep.mubr.f32.mxu0 0.0
      %508 = vmatmul.mubr.f32.gmra.mrb[0].mxu0 %v356
      %v509 = vpop.f32.mrb[0].mxu0
      %v510 = vadd.f32 %v381, %v509
      %v511 = vpop.f32.mrb[0].mxu0
      %512 = vmatprep.mubr.f32.mxu0 0.0
      %513 = vmatmul.mubr.f32.gmra.mrb[0].mxu0 %v357
      %v514 = vpop.f32.mrb[0].mxu0
      %v515 = vadd.f32 %v381, %v514
      %v516 = vpop.f32.mrb[0].mxu0
      %517 = vmatprep.mubr.f32.mxu0 0.0
      %518 = vmatmul.mubr.f32.gmra.mrb[0].mxu0 %v358
      %v519 = vpop.f32.mrb[0].mxu0
      %v520 = vadd.f32 %v381, %v519
      %v521 = vpop.f32.mrb[0].mxu0
      %522 = vmatprep.mubr.f32.mxu0 0.0
      %523 = vmatmul.mubr.f32.gmra.mrb[0].mxu0 %v359
      %v524 = vpop.f32.mrb[0].mxu0
      %v525 = vadd.f32 %v381, %v524
      %v526 = vpop.f32.mrb[0].mxu0
      %527 = vdwg.mxu0
      %v528 = vmax.f32 %v450, 0.0
      %v529 = vmax.f32 %v455, 0.0
      %v530 = vmax.f32 %v460, 0.0
      %v531 = vmax.f32 %v465, 0.0
      %v532 = vmax.f32 %v470, 0.0
      %v533 = vmax.f32 %v475, 0.0
      %v534 = vmax.f32 %v480, 0.0
      %v535 = vmax.f32 %v485, 0.0
      %v536 = vmax.f32 %v490, 0.0
      %v537 = vmax.f32 %v495, 0.0
      %v538 = vmax.f32 %v500, 0.0
      %v539 = vmax.f32 %v505, 0.0
      %v540 = vmax.f32 %v510, 0.0
      %v541 = vmax.f32 %v515, 0.0
      %v542 = vmax.f32 %v520, 0.0
      %v543 = vmax.f32 %v525, 0.0
      %v544 = vld [vmem:[#allocation8] sm:$0xff]
      %v545 = vld [vmem:[#allocation8 + $0x8] sm:$0xff]
      %v546 = vld [vmem:[#allocation8 + $0x10] sm:$0xff]
      %v547 = vld [vmem:[#allocation8 + $0x18] sm:$0xff]
      %v548 = vld [vmem:[#allocation8 + $0x20] sm:$0xff]
      %v549 = vld [vmem:[#allocation8 + $0x28] sm:$0xff]
      %v550 = vld [vmem:[#allocation8 + $0x30] sm:$0xff]
      %v551 = vld [vmem:[#allocation8 + $0x38] sm:$0xff]
      %v552 = vld [vmem:[#allocation8 + $0x40] sm:$0xff]
      %v553 = vld [vmem:[#allocation8 + $0x48] sm:$0xff]
      %v554 = vld [vmem:[#allocation8 + $0x50] sm:$0xff]
      %v555 = vld [vmem:[#allocation8 + $0x58] sm:$0xff]
      %v556 = vld [vmem:[#allocation8 + $0x60] sm:$0xff]
      %v557 = vld [vmem:[#allocation8 + $0x68] sm:$0xff]
      %v558 = vld [vmem:[#allocation8 + $0x70] sm:$0xff]
      %v559 = vld [vmem:[#allocation8 + $0x78] sm:$0xff]
      %v560 = vld [vmem:[%s5] sm:$0x1]
      %v562 = vlaneseq
      %v563 = vshrl.u32 %v562, 7
      %v564 = vsub.s32 0, %v563
      %v565 = vrot.slane %v560, %v564
      %567 = vmatprep.subr.mxu0 0.0
      %568 = vmatpush1.msra.mxu0 %v544
      %569 = vmatprep.subr.mxu0 0.0
      %570 = vmatpush1.msra.mxu0 %v545
      %571 = vmatprep.subr.mxu0 0.0
      %572 = vmatpush1.msra.mxu0 %v546
      %573 = vmatprep.subr.mxu0 0.0
      %574 = vmatpush1.msra.mxu0 %v547
      %575 = vmatprep.subr.mxu0 0.0
      %576 = vmatpush1.msra.mxu0 %v548
      %577 = vmatprep.subr.mxu0 0.0
      %578 = vmatpush1.msra.mxu0 %v549
      %579 = vmatprep.subr.mxu0 0.0
      %580 = vmatpush1.msra.mxu0 %v550
      %581 = vmatprep.subr.mxu0 0.0
      %582 = vmatpush1.msra.mxu0 %v551
      %583 = vmatprep.subr.mxu0 0.0
      %584 = vmatpush1.msra.mxu0 %v552
      %585 = vmatprep.subr.mxu0 0.0
      %586 = vmatpush1.msra.mxu0 %v553
      %587 = vmatprep.subr.mxu0 0.0
      %588 = vmatpush1.msra.mxu0 %v554
      %589 = vmatprep.subr.mxu0 0.0
      %590 = vmatpush1.msra.mxu0 %v555
      %591 = vmatprep.subr.mxu0 0.0
      %592 = vmatpush1.msra.mxu0 %v556
      %593 = vmatprep.subr.mxu0 0.0
      %594 = vmatpush1.msra.mxu0 %v557
      %595 = vmatprep.subr.mxu0 0.0
      %596 = vmatpush1.msra.mxu0 %v558
      %597 = vmatprep.subr.mxu0 0.0
      %598 = vmatpush1.msra.mxu0 %v559
      %599 = vmatprep.subr.mxu0 0.0
      %600 = vmatpush1.msra.mxu0 0.0
      %601 = vmatprep.subr.mxu0 0.0
      %602 = vmatpush1.msra.mxu0 0.0
      %603 = vmatprep.subr.mxu0 0.0
      %604 = vmatpush1.msra.mxu0 0.0
      %605 = vmatprep.subr.mxu0 0.0
      %606 = vmatpush1.msra.mxu0 0.0
      %607 = vmatprep.subr.mxu0 0.0
      %608 = vmatpush1.msra.mxu0 0.0
      %609 = vmatprep.subr.mxu0 0.0
      %610 = vmatpush1.msra.mxu0 0.0
      %611 = vmatprep.subr.mxu0 0.0
      %612 = vmatpush1.msra.mxu0 0.0
      %613 = vmatprep.subr.mxu0 0.0
      %614 = vmatpush1.msra.mxu0 0.0
      %615 = vmatprep.subr.mxu0 0.0
      %616 = vmatpush1.msra.mxu0 0.0
      %617 = vmatprep.subr.mxu0 0.0
      %618 = vmatpush1.msra.mxu0 0.0
      %619 = vmatprep.subr.mxu0 0.0
      %620 = vmatpush1.msra.mxu0 0.0
      %621 = vmatprep.subr.mxu0 0.0
      %622 = vmatpush1.msra.mxu0 0.0
      %623 = vmatprep.subr.mxu0 0.0
      %624 = vmatpush1.msra.mxu0 0.0
      %625 = vmatprep.subr.mxu0 0.0
      %626 = vmatpush1.msra.mxu0 0.0
      %627 = vmatprep.subr.mxu0 0.0
      %628 = vmatpush1.msra.mxu0 0.0
      %629 = vmatprep.subr.mxu0 0.0
      %630 = vmatpush1.msra.mxu0 0.0
      %631 = vmatprep.mubr.f32.mxu0 0.0
      %632 = vmatmul.mubr.f32.gmra.mrb[0].mxu0 %v528
      %v633 = vpop.f32.mrb[0].mxu0
      %v634 = vadd.f32 %v565, %v633
      %v635 = vpop.f32.mrb[0].mxu0
      %636 = vmatprep.mubr.f32.mxu0 0.0
      %637 = vmatmul.mubr.f32.gmra.mrb[0].mxu0 %v529
      %v638 = vpop.f32.mrb[0].mxu0
      %v639 = vadd.f32 %v565, %v638
      %v640 = vpop.f32.mrb[0].mxu0
      %641 = vmatprep.mubr.f32.mxu0 0.0
      %642 = vmatmul.mubr.f32.gmra.mrb[0].mxu0 %v530
      %v643 = vpop.f32.mrb[0].mxu0
      %v644 = vadd.f32 %v565, %v643
      %v645 = vpop.f32.mrb[0].mxu0
      %646 = vmatprep.mubr.f32.mxu0 0.0
      %647 = vmatmul.mubr.f32.gmra.mrb[0].mxu0 %v531
      %v648 = vpop.f32.mrb[0].mxu0
      %v649 = vadd.f32 %v565, %v648
      %v650 = vpop.f32.mrb[0].mxu0
      %651 = vmatprep.mubr.f32.mxu0 0.0
      %652 = vmatmul.mubr.f32.gmra.mrb[0].mxu0 %v532
      %v653 = vpop.f32.mrb[0].mxu0
      %v654 = vadd.f32 %v565, %v653
      %v655 = vpop.f32.mrb[0].mxu0
      %656 = vmatprep.mubr.f32.mxu0 0.0
      %657 = vmatmul.mubr.f32.gmra.mrb[0].mxu0 %v533
      %v658 = vpop.f32.mrb[0].mxu0
      %v659 = vadd.f32 %v565, %v658
      %v660 = vpop.f32.mrb[0].mxu0
      %661 = vmatprep.mubr.f32.mxu0 0.0
      %662 = vmatmul.mubr.f32.gmra.mrb[0].mxu0 %v534
      %v663 = vpop.f32.mrb[0].mxu0
      %v664 = vadd.f32 %v565, %v663
      %v665 = vpop.f32.mrb[0].mxu0
      %666 = vmatprep.mubr.f32.mxu0 0.0
      %667 = vmatmul.mubr.f32.gmra.mrb[0].mxu0 %v535
      %v668 = vpop.f32.mrb[0].mxu0
      %v669 = vadd.f32 %v565, %v668
      %v670 = vpop.f32.mrb[0].mxu0
      %671 = vmatprep.mubr.f32.mxu0 0.0
      %672 = vmatmul.mubr.f32.gmra.mrb[0].mxu0 %v536
      %v673 = vpop.f32.mrb[0].mxu0
      %v674 = vadd.f32 %v565, %v673
      %v675 = vpop.f32.mrb[0].mxu0
      %676 = vmatprep.mubr.f32.mxu0 0.0
      %677 = vmatmul.mubr.f32.gmra.mrb[0].mxu0 %v537
      %v678 = vpop.f32.mrb[0].mxu0
      %v679 = vadd.f32 %v565, %v678
      %v680 = vpop.f32.mrb[0].mxu0
      %681 = vmatprep.mubr.f32.mxu0 0.0
      %682 = vmatmul.mubr.f32.gmra.mrb[0].mxu0 %v538
      %v683 = vpop.f32.mrb[0].mxu0
      %v684 = vadd.f32 %v565, %v683
      %v685 = vpop.f32.mrb[0].mxu0
      %686 = vmatprep.mubr.f32.mxu0 0.0
      %687 = vmatmul.mubr.f32.gmra.mrb[0].mxu0 %v539
      %v688 = vpop.f32.mrb[0].mxu0
      %v689 = vadd.f32 %v565, %v688
      %v690 = vpop.f32.mrb[0].mxu0
      %691 = vmatprep.mubr.f32.mxu0 0.0
      %692 = vmatmul.mubr.f32.gmra.mrb[0].mxu0 %v540
      %v693 = vpop.f32.mrb[0].mxu0
      %v694 = vadd.f32 %v565, %v693
      %v695 = vpop.f32.mrb[0].mxu0
      %696 = vmatprep.mubr.f32.mxu0 0.0
      %697 = vmatmul.mubr.f32.gmra.mrb[0].mxu0 %v541
      %v698 = vpop.f32.mrb[0].mxu0
      %v699 = vadd.f32 %v565, %v698
      %v700 = vpop.f32.mrb[0].mxu0
      %701 = vmatprep.mubr.f32.mxu0 0.0
      %702 = vmatmul.mubr.f32.gmra.mrb[0].mxu0 %v542
      %v703 = vpop.f32.mrb[0].mxu0
      %v704 = vadd.f32 %v565, %v703
      %v705 = vpop.f32.mrb[0].mxu0
      %706 = vmatprep.mubr.f32.mxu0 0.0
      %707 = vmatmul.mubr.f32.gmra.mrb[0].mxu0 %v543
      %v708 = vpop.f32.mrb[0].mxu0
      %v709 = vadd.f32 %v565, %v708
      %v710 = vpop.f32.mrb[0].mxu0
      %711 = vdwg.mxu0
      %v712 = vmax.f32 %v634, 0.0
      %v713 = vmax.f32 %v639, 0.0
      %v714 = vmax.f32 %v644, 0.0
      %v715 = vmax.f32 %v649, 0.0
      %v716 = vmax.f32 %v654, 0.0
      %v717 = vmax.f32 %v659, 0.0
      %v718 = vmax.f32 %v664, 0.0
      %v719 = vmax.f32 %v669, 0.0
      %v720 = vmax.f32 %v674, 0.0
      %v721 = vmax.f32 %v679, 0.0
      %v722 = vmax.f32 %v684, 0.0
      %v723 = vmax.f32 %v689, 0.0
      %v724 = vmax.f32 %v694, 0.0
      %v725 = vmax.f32 %v699, 0.0
      %v726 = vmax.f32 %v704, 0.0
      %v727 = vmax.f32 %v709, 0.0
      %728 = vst [vmem:[%s6] sm:$0xff] %v712
      %729 = vst [vmem:[%s6 + $0x8] sm:$0xff] %v713
      %730 = vst [vmem:[%s6 + $0x10] sm:$0xff] %v714
      %731 = vst [vmem:[%s6 + $0x18] sm:$0xff] %v715
      %732 = vst [vmem:[%s6 + $0x20] sm:$0xff] %v716
      %733 = vst [vmem:[%s6 + $0x28] sm:$0xff] %v717
      %734 = vst [vmem:[%s6 + $0x30] sm:$0xff] %v718
      %735 = vst [vmem:[%s6 + $0x38] sm:$0xff] %v719
      %736 = vst [vmem:[%s6 + $0x40] sm:$0xff] %v720
      %737 = vst [vmem:[%s6 + $0x48] sm:$0xff] %v721
      %738 = vst [vmem:[%s6 + $0x50] sm:$0xff] %v722
      %739 = vst [vmem:[%s6 + $0x58] sm:$0xff] %v723
      %740 = vst [vmem:[%s6 + $0x60] sm:$0xff] %v724
      %741 = vst [vmem:[%s6 + $0x68] sm:$0xff] %v725
      %742 = vst [vmem:[%s6 + $0x70] sm:$0xff] %v726
      %743 = vst [vmem:[%s6 + $0x78] sm:$0xff] %v727
      %s744 = smul.u32 0, 128
      %v745 = vlaneseq
      %v746 = vshrl.u32 %v745, 7
      %v747 = vadd.s32 %v746, 8
      %v748 = vadd.s32 %v746, 16
      %v749 = vadd.s32 %v746, 24
      %v750 = vadd.s32 %v746, 32
      %v751 = vadd.s32 %v746, 40
      %v752 = vadd.s32 %v746, 48
      %v753 = vadd.s32 %v746, 56
      %v754 = vadd.s32 %v746, 64
      %v755 = vadd.s32 %v746, 72
      %v756 = vadd.s32 %v746, 80
      %v757 = vadd.s32 %v746, 88
      %v758 = vadd.s32 %v746, 96
      %v759 = vadd.s32 %v746, 104
      %v760 = vadd.s32 %v746, 112
      %v761 = vadd.s32 %v746, 120
      %v762 = vstv %s744
      %v763 = vadd.s32 %v762, %v746
      %v764 = vadd.s32 %v762, %v747
      %v765 = vadd.s32 %v762, %v748
      %v766 = vadd.s32 %v762, %v749
      %v767 = vadd.s32 %v762, %v750
      %v768 = vadd.s32 %v762, %v751
      %v769 = vadd.s32 %v762, %v752
      %v770 = vadd.s32 %v762, %v753
      %v771 = vadd.s32 %v762, %v754
      %v772 = vadd.s32 %v762, %v755
      %v773 = vadd.s32 %v762, %v756
      %v774 = vadd.s32 %v762, %v757
      %v775 = vadd.s32 %v762, %v758
      %v776 = vadd.s32 %v762, %v759
      %v777 = vadd.s32 %v762, %v760
      %v778 = vadd.s32 %v762, %v761
      %vm779 = vcmp.lt.s32.totalorder %v763, 16
      %vm780 = vcmp.lt.s32.totalorder %v764, 16
      %vm781 = vcmp.lt.s32.totalorder %v765, 16
      %vm782 = vcmp.lt.s32.totalorder %v766, 16
      %vm783 = vcmp.lt.s32.totalorder %v767, 16
      %vm784 = vcmp.lt.s32.totalorder %v768, 16
      %vm785 = vcmp.lt.s32.totalorder %v769, 16
      %vm786 = vcmp.lt.s32.totalorder %v770, 16
      %vm787 = vcmp.lt.s32.totalorder %v771, 16
      %vm788 = vcmp.lt.s32.totalorder %v772, 16
      %vm789 = vcmp.lt.s32.totalorder %v773, 16
      %vm790 = vcmp.lt.s32.totalorder %v774, 16
      %vm791 = vcmp.lt.s32.totalorder %v775, 16
      %vm792 = vcmp.lt.s32.totalorder %v776, 16
      %vm793 = vcmp.lt.s32.totalorder %v777, 16
      %vm794 = vcmp.lt.s32.totalorder %v778, 16
      %v795 = vsel %vm779, 1, 0
      %v796 = vsel %vm780, 1, 0
      %v797 = vsel %vm781, 1, 0
      %v798 = vsel %vm782, 1, 0
      %v799 = vsel %vm783, 1, 0
      %v800 = vsel %vm784, 1, 0
      %v801 = vsel %vm785, 1, 0
      %v802 = vsel %vm786, 1, 0
      %v803 = vsel %vm787, 1, 0
      %v804 = vsel %vm788, 1, 0
      %v805 = vsel %vm789, 1, 0
      %v806 = vsel %vm790, 1, 0
      %v807 = vsel %vm791, 1, 0
      %v808 = vsel %vm792, 1, 0
      %v809 = vsel %vm793, 1, 0
      %v810 = vsel %vm794, 1, 0
      %v811 = vcvt.s32.f32 %v795
      %v812 = vcvt.s32.f32 %v796
      %v813 = vcvt.s32.f32 %v797
      %v814 = vcvt.s32.f32 %v798
      %v815 = vcvt.s32.f32 %v799
      %v816 = vcvt.s32.f32 %v800
      %v817 = vcvt.s32.f32 %v801
      %v818 = vcvt.s32.f32 %v802
      %v819 = vcvt.s32.f32 %v803
      %v820 = vcvt.s32.f32 %v804
      %v821 = vcvt.s32.f32 %v805
      %v822 = vcvt.s32.f32 %v806
      %v823 = vcvt.s32.f32 %v807
      %v824 = vcvt.s32.f32 %v808
      %v825 = vcvt.s32.f32 %v809
      %v826 = vcvt.s32.f32 %v810
      %v827 = vmul.f32 %v712, %v811
      %v828 = vmul.f32 %v713, %v812
      %v829 = vmul.f32 %v714, %v813
      %v830 = vmul.f32 %v715, %v814
      %v831 = vmul.f32 %v716, %v815
      %v832 = vmul.f32 %v717, %v816
      %v833 = vmul.f32 %v718, %v817
      %v834 = vmul.f32 %v719, %v818
      %v835 = vmul.f32 %v720, %v819
      %v836 = vmul.f32 %v721, %v820
      %v837 = vmul.f32 %v722, %v821
      %v838 = vmul.f32 %v723, %v822
      %v839 = vmul.f32 %v724, %v823
      %v840 = vmul.f32 %v725, %v824
      %v841 = vmul.f32 %v726, %v825
      %v842 = vmul.f32 %v727, %v826
      %v843 = vadd.f32 %v827, %v828
      %v844 = vadd.f32 %v843, %v829
      %v845 = vadd.f32 %v844, %v830
      %v846 = vadd.f32 %v845, %v831
      %v847 = vadd.f32 %v846, %v832
      %v848 = vadd.f32 %v847, %v833
      %v849 = vadd.f32 %v848, %v834
      %v850 = vadd.f32 %v849, %v835
      %v851 = vadd.f32 %v850, %v836
      %v852 = vadd.f32 %v851, %v837
      %v853 = vadd.f32 %v852, %v838
      %v854 = vadd.f32 %v853, %v839
      %v855 = vadd.f32 %v854, %v840
      %v856 = vadd.f32 %v855, %v841
      %v857 = vadd.f32 %v856, %v842
      %v858 = vrot.slane %v857, 4
      %v859 = vadd.f32 %v857, %v858
      %v860 = vrot.slane %v859, 2
      %v861 = vadd.f32 %v859, %v860
      %v862 = vrot.slane %v861, 1
      %v863 = vadd.f32 %v861, %v862
      %v864 = vmul.f32 %v827, %v827
      %v865 = vmul.f32 %v828, %v828
      %v866 = vmul.f32 %v829, %v829
      %v867 = vmul.f32 %v830, %v830
      %v868 = vmul.f32 %v831, %v831
      %v869 = vmul.f32 %v832, %v832
      %v870 = vmul.f32 %v833, %v833
      %v871 = vmul.f32 %v834, %v834
      %v872 = vmul.f32 %v835, %v835
      %v873 = vmul.f32 %v836, %v836
      %v874 = vmul.f32 %v837, %v837
      %v875 = vmul.f32 %v838, %v838
      %v876 = vmul.f32 %v839, %v839
      %v877 = vmul.f32 %v840, %v840
      %v878 = vmul.f32 %v841, %v841
      %v879 = vmul.f32 %v842, %v842
      %v880 = vadd.f32 %v864, %v865
      %v881 = vadd.f32 %v880, %v866
      %v882 = vadd.f32 %v881, %v867
      %v883 = vadd.f32 %v882, %v868
      %v884 = vadd.f32 %v883, %v869
      %v885 = vadd.f32 %v884, %v870
      %v886 = vadd.f32 %v885, %v871
      %v887 = vadd.f32 %v886, %v872
      %v888 = vadd.f32 %v887, %v873
      %v889 = vadd.f32 %v888, %v874
      %v890 = vadd.f32 %v889, %v875
      %v891 = vadd.f32 %v890, %v876
      %v892 = vadd.f32 %v891, %v877
      %v893 = vadd.f32 %v892, %v878
      %v894 = vadd.f32 %v893, %v879
      %v895 = vrot.slane %v894, 4
      %v896 = vadd.f32 %v894, %v895
      %v897 = vrot.slane %v896, 2
      %v898 = vadd.f32 %v896, %v897
      %v899 = vrot.slane %v898, 1
      %v900 = vadd.f32 %v898, %v899
      %vm901 = vcmp.eq.s32.totalorder %v746, 0
      %v902 = vsel %vm901, %v863, 0.0
      %vm903 = vcmp.eq.s32.totalorder %v746, 1
      %v904 = vsel %vm903, %v900, 0.0
      %v905 = vadd.f32 %v902, %v904
      %906 = vst [vmem:[%s7] sm:$0xff] %v905
    $region49: #{_gin_layer.2} parent=1 // pred_fallthru
      _
    // Predicated region
    $region50: #{_gin_layer.2} parent=1 // pred_check
      _
    $region51: #{_gin_layer.2} parent=1 // pred_check_branch
      %908 = sbr.rel (0) target = $region53
    $region52: #{_gin_layer.2} parent=1 // pred_region
      _
    $region53: #{_gin_layer.2} parent=1 // pred_fallthru
      _
    // Predicated region
    $region54: #{_gin_layer.2} parent=1 // pred_check
      _
    $region55: #{_gin_layer.2} parent=1 // pred_check_branch
      %910 = sbr.rel (0) target = $region57
    $region56: #{_gin_layer.2} parent=1 // pred_region
      _
    $region57: #{_gin_layer.2} parent=1 // pred_fallthru
      _
    // Predicated region
    $region58: #{_gin_layer.2} parent=1 // pred_check
      _
    $region59: #{_gin_layer.2} parent=1 // pred_check_branch
      %912 = sbr.rel (0) target = $region61
    $region60: #{_gin_layer.2} parent=1 // pred_region
      _
    $region61: #{_gin_layer.2} parent=1 // pred_fallthru
      _
    // Predicated region
    $region62: #{_gin_layer.2} parent=1 // pred_check
      _
    $region63: #{_gin_layer.2} parent=1 // pred_check_branch
      %914 = sbr.rel (0) target = $region65
    $region64: #{_gin_layer.2} parent=1 // pred_region
      _
    $region65: #{_gin_layer.2} parent=1 // pred_fallthru
      _
    %915 = vsyncpa [#allocation4], 1
    %916 = vsyncpa [#allocation6], 1
    %917 = vsyncpa [#allocation9], 1

</llo_original>
